<compile_context>
chip_gen: v5e
topology: v5e:2x2
jax: 0.10.0
libtpu: 0.0.40
codegen_flags: <defaults>
</compile_context>

<pallas_src>
from functools import partial

import numpy as np
import jax
import jax.numpy as jnp
from jax.experimental import pallas as pl
from jax.experimental.pallas import tpu as pltpu

_LANES = 128
_HIGHEST = jax.lax.Precision.HIGHEST
_VMEM = pl.BlockSpec(memory_space=pltpu.MemorySpace.VMEM)


def _round_up(n, m):
    return ((n + m - 1) // m) * m


def _dot(a, b):
    # Exact f32 MXU matmul.  At K=32 the extra MXU passes of HIGHEST are
    # negligible; drop to Precision.HIGH / bf16 only at larger hidden sizes
    # (and re-validate the 1e-5 reference tolerance).
    return jnp.dot(a, b, precision=_HIGHEST, preferred_element_type=jnp.float32)


# --------------------------------- kernels ----------------------------------
# All operands are whole-array VMEM blocks (block == full array dims, so the
# (8,128) divisibility rule does not apply).  Outputs are lane-padded to 128
# so every store is an unmasked full-lane vst.

def _fused3_y2_kernel(x0_ref, x1_ref, w0_ref, b0_ref, w1f_ref, w1l_ref, b1_ref,
                      w2f_ref, b2_ref, y_ref, y2_ref):
    """layer0(x0) -> layer1 on rows of [h0; x1] -> layer[-1] on every row.

    The reference concatenate is replaced by two dots into static row slices
    (no concatenated VMEM buffer, better MXU overlap)."""
    m0 = x0_ref.shape[0]
    m1 = x1_ref.shape[0]
    h0 = _dot(x0_ref[...], w0_ref[...]) + b0_ref[...]           # (m0, P0) lane-padded
    y_top = _dot(h0, w1f_ref[...]) + b1_ref[...]                # (m0, P1)
    y_bot = _dot(x1_ref[...], w1l_ref[...]) + b1_ref[...]       # (m1, P1)
    y_ref[pl.ds(0, m0), :] = y_top.astype(y_ref.dtype)
    y_ref[pl.ds(m0, m1), :] = y_bot.astype(y_ref.dtype)
    y2_ref[pl.ds(0, m0), :] = (_dot(y_top, w2f_ref[...]) + b2_ref[...]).astype(y2_ref.dtype)
    y2_ref[pl.ds(m0, m1), :] = (_dot(y_bot, w2f_ref[...]) + b2_ref[...]).astype(y2_ref.dtype)


def _fused3_kernel(x0_ref, x1_ref, w0_ref, b0_ref, w1f_ref, w1l_ref, b1_ref, y_ref):
    """Same as above, without the layer[-1] branch (g3 empty)."""
    m0 = x0_ref.shape[0]
    m1 = x1_ref.shape[0]
    h0 = _dot(x0_ref[...], w0_ref[...]) + b0_ref[...]
    y_ref[pl.ds(0, m0), :] = (_dot(h0, w1f_ref[...]) + b1_ref[...]).astype(y_ref.dtype)
    y_ref[pl.ds(m0, m1), :] = (_dot(x1_ref[...], w1l_ref[...]) + b1_ref[...]).astype(y_ref.dtype)


def _fused2_y2_kernel(x1_ref, w0_ref, b0_ref, wlf_ref, bl_ref, y_ref, y2_ref):
    """x0 empty: layer0(x1), layer[-1] on every row."""
    y = _dot(x1_ref[...], w0_ref[...]) + b0_ref[...]
    y_ref[...] = y.astype(y_ref.dtype)
    y2_ref[...] = (_dot(y, wlf_ref[...]) + bl_ref[...]).astype(y2_ref.dtype)


def _fused2_kernel(x1_ref, w0_ref, b0_ref, y_ref):
    y_ref[...] = (_dot(x1_ref[...], w0_ref[...]) + b0_ref[...]).astype(y_ref.dtype)


def _linear1_kernel(x_ref, w_ref, b_ref, o_ref):
    o_ref[...] = (_dot(x_ref[...], w_ref[...]) + b_ref[...]).astype(o_ref.dtype)


def _chain_kernel(x_ref, w0_ref, b0_ref, wst_ref, bst_ref, o_ref):
    """forward_c fused: first layer (lane-padded-only weight) followed by an
    (L, 128, 128) stack of K-padded layers; the activation stays in
    vregs/VMEM between layers (statically unrolled loop)."""
    h = _dot(x_ref[...], w0_ref[...]) + b0_ref[...]
    for l in range(wst_ref.shape[0]):
        h = _dot(h, wst_ref[l]) + bst_ref[l]
    o_ref[...] = h.astype(o_ref.dtype)


# --------------------------- jitted kernel wrappers --------------------------

def _route(y, y2, participants, sizes, g3, out_f, out_fl):
    """Trace-time per-client row slicing; compiles into the same executable."""
    outs = []
    off = 0
    for c, s in zip(participants, sizes):
        if c in g3:
            outs.append(y2[off:off + s, :out_fl])
        else:
            outs.append(y[off:off + s, :out_f])
        off += s
    return tuple(outs)


@partial(jax.jit, static_argnames=("participants", "sizes", "g3", "out_f", "out_fl"))
def _forward3_routed(x0, x1, w0, b0, w1f, w1l, b1, w2f, b2,
                     participants, sizes, g3, out_f, out_fl):
    m = x0.shape[0] + x1.shape[0]
    p1 = w1f.shape[1]
    dt = x1.dtype
    need_y2 = any(c in g3 for c in participants)
    if need_y2:
        y, y2 = pl.pallas_call(
            _fused3_y2_kernel,
            out_shape=(jax.ShapeDtypeStruct((m, p1), dt),
                       jax.ShapeDtypeStruct((m, w2f.shape[1]), dt)),
            in_specs=[_VMEM] * 9,
            out_specs=(_VMEM, _VMEM),
        )(x0, x1, w0, b0, w1f, w1l, b1, w2f, b2)
    else:
        y = pl.pallas_call(
            _fused3_kernel,
            out_shape=jax.ShapeDtypeStruct((m, p1), dt),
            in_specs=[_VMEM] * 7,
            out_specs=_VMEM,
        )(x0, x1, w0, b0, w1f, w1l, b1)
        y2 = None
    return _route(y, y2, participants, sizes, g3, out_f, out_fl)


@partial(jax.jit, static_argnames=("participants", "sizes", "g3", "out_f", "out_fl"))
def _forward2_routed(x1, w0, b0, wlf, bl, participants, sizes, g3, out_f, out_fl):
    m = x1.shape[0]
    p0 = w0.shape[1]
    dt = x1.dtype
    need_y2 = any(c in g3 for c in participants)
    if need_y2:
        y, y2 = pl.pallas_call(
            _fused2_y2_kernel,
            out_shape=(jax.ShapeDtypeStruct((m, p0), dt),
                       jax.ShapeDtypeStruct((m, wlf.shape[1]), dt)),
            in_specs=[_VMEM] * 5,
            out_specs=(_VMEM, _VMEM),
        )(x1, w0, b0, wlf, bl)
    else:
        y = pl.pallas_call(
            _fused2_kernel,
            out_shape=jax.ShapeDtypeStruct((m, p0), dt),
            in_specs=[_VMEM] * 3,
            out_specs=_VMEM,
        )(x1, w0, b0)
        y2 = None
    return _route(y, y2, participants, sizes, g3, out_f, out_fl)


@partial(jax.jit, static_argnames=("out_f",))
def _linear1_forward(x, w, b, out_f):
    y = pl.pallas_call(
        _linear1_kernel,
        out_shape=jax.ShapeDtypeStruct((x.shape[0], w.shape[1]), x.dtype),
        in_specs=[_VMEM] * 3,
        out_specs=_VMEM,
    )(x, w, b)
    return y[:, :out_f]


@partial(jax.jit, static_argnames=("out_f",))
def _chain_forward(x, w0, b0, wstack, bstack, out_f):
    y = pl.pallas_call(
        _chain_kernel,
        out_shape=jax.ShapeDtypeStruct((x.shape[0], wstack.shape[-1]), x.dtype),
        in_specs=[_VMEM] * 5,
        out_specs=_VMEM,
    )(x, w0, b0, wstack, bstack)
    return y[:, :out_f]


# ----------------------------------- module ---------------------------------

class _Layer:
    __slots__ = ("wt_lane", "wt_full", "b", "in_f", "out_f")

    def __init__(self, wt_lane, wt_full, b, in_f, out_f):
        self.wt_lane = wt_lane    # (in_f, out_p): lane-padded only (no K padding)
        self.wt_full = wt_full    # (in_p, out_p): K also padded (zero rows) for
        self.b = b                #   consuming lane-padded intermediates
        self.in_f = in_f
        self.out_f = out_f


class ServerGenJax:
    """JAX/Pallas port of ServerGen with nn.Linear additional layers."""

    def __init__(self):
        self.additional_layers_sg = []
        self.additional_layers_ref = []   # original (w, b), for reference checks
        self.additional_layers_count = 0
        self._chain_cache = {}

    def add_layer(self, w, b):
        w = jnp.asarray(w, jnp.float32)
        b = jnp.asarray(b, jnp.float32)
        out_f, in_f = w.shape
        out_p = _round_up(out_f, _LANES)
        in_p = _round_up(in_f, _LANES)
        wt_lane = jnp.zeros((in_f, out_p), jnp.float32).at[:, :out_f].set(w.T)
        wt_full = jnp.zeros((in_p, out_p), jnp.float32).at[:in_f, :out_f].set(w.T)
        bp = jnp.zeros((1, out_p), jnp.float32).at[0, :out_f].set(b)
        self.additional_layers_sg.append(_Layer(wt_lane, wt_full, bp, in_f, out_f))
        self.additional_layers_ref.append((w, b))
        self.additional_layers_count += 1
        self._chain_cache.clear()

    def forward(self, x0, x1, g1_participants, g2_participants,
                g3_participants, batch_sizes):
        participants = tuple(g1_participants) + tuple(g2_participants)
        sizes = tuple(int(batch_sizes[c]) for c in participants)
        g3 = tuple(g3_participants)
        x1 = jnp.asarray(x1, jnp.float32)
        last = self.additional_layers_sg[-1]
        n0 = 0 if x0 is None else len(x0)
        if n0 > 0:
            x0 = jnp.asarray(x0, jnp.float32)
            l0 = self.additional_layers_sg[0]
            l1 = self.additional_layers_sg[1]
            outs = _forward3_routed(
                x0, x1, l0.wt_lane, l0.b, l1.wt_full, l1.wt_lane, l1.b,
                last.wt_full, last.b,
                participants=participants, sizes=sizes, g3=g3,
                out_f=l1.out_f, out_fl=last.out_f)
        else:
            l0 = self.additional_layers_sg[0]
            outs = _forward2_routed(
                x1, l0.wt_lane, l0.b, last.wt_full, last.b,
                participants=participants, sizes=sizes, g3=g3,
                out_f=l0.out_f, out_fl=last.out_f)
        # Host-side scatter into client-indexed list (no device dispatches).
        server_outputs = [None] * len(participants)
        for c, o in zip(participants, outs):
            server_outputs[c] = o
        return server_outputs

    def forward_c(self, x, server_cut_indeces):
        lo, hi = server_cut_indeces
        sel = tuple(i for i in range(self.additional_layers_count) if lo <= i <= hi)
        if not sel:
            return x
        x = jnp.asarray(x, jnp.float32)
        layers = [self.additional_layers_sg[i] for i in sel]
        first, rest = layers[0], layers[1:]
        if not rest:
            return _linear1_forward(x, first.wt_lane, first.b, out_f=first.out_f)
        shapes = {tuple(r.wt_full.shape) for r in rest}
        chainable = (len(shapes) == 1
                     and rest[0].wt_full.shape[0] == first.wt_full.shape[1]
                     and (len(rest) == 1
                          or rest[0].wt_full.shape[0] == rest[0].wt_full.shape[1]))
        if chainable:
            if sel not in self._chain_cache:
                self._chain_cache[sel] = (
                    jnp.stack([r.wt_full for r in rest]),
                    jnp.stack([r.b for r in rest]))
            wstack, bstack = self._chain_cache[sel]
            return _chain_forward(x, first.wt_lane, first.b, wstack, bstack,
                                  out_f=layers[-1].out_f)
        # Fallback (padded layer shapes differ): one pallas_call per layer.
        h = x
        for layer in layers:
            h = _linear1_forward(h, layer.wt_lane, layer.b, out_f=layer.out_f)
        return h


def _init_linear(key, out_features, in_features):
    """Deterministic Kaiming-uniform-ish init matching nn.Linear shapes."""
    kw, kb = jax.random.split(key)
    bound = 1.0 / np.sqrt(in_features)
    w = jax.random.uniform(kw, (out_features, in_features),
                           minval=-bound, maxval=bound, dtype=jnp.float32)
    b = jax.random.uniform(kb, (out_features,),
                           minval=-bound, maxval=bound, dtype=jnp.float32)
    return w, b


if __name__ == "__main__":
    hidden = 32
    batch_sizes = [8, 8, 8, 8]          # per-client batch sizes
    g1_participants = [0, 1]            # clients feeding x0
    g2_participants = [2, 3]            # clients feeding x1
    g3_participants = [1, 3]            # clients routed through the last layer

    key = jax.random.PRNGKey(0)
    k0, k1, k2, kx0, kx1 = jax.random.split(key, 5)

    model = ServerGenJax()
    model.add_layer(*_init_linear(k0, hidden, hidden))   # layer 0 (x0 path)
    model.add_layer(*_init_linear(k1, hidden, hidden))   # layer 1 (cat path)
    model.add_layer(*_init_linear(k2, hidden, hidden))   # last layer (g3 path)

    n_g1 = int(np.sum(np.array(batch_sizes)[np.array(g1_participants)]))
    n_g2 = int(np.sum(np.array(batch_sizes)[np.array(g2_participants)]))
    x0 = jax.random.normal(kx0, (n_g1, hidden), dtype=jnp.float32)
    x1 = jax.random.normal(kx1, (n_g2, hidden), dtype=jnp.float32)

    outputs = model.forward(x0, x1, g1_participants, g2_participants,
                            g3_participants, batch_sizes)
    for o in outputs:
        assert o is not None
        jax.block_until_ready(o)

    # Pure-JAX reference of the same forward (f32 HIGHEST to match the kernel).
    def ref_linear(x, w, b):
        return jnp.dot(x, w.T, precision=jax.lax.Precision.HIGHEST,
                       preferred_element_type=jnp.float32) + b

    (w0, b0r), (w1, b1r), (w2, b2r) = model.additional_layers_ref
    xr = ref_linear(jnp.concatenate((ref_linear(x0, w0, b0r), x1), axis=0),
                    w1, b1r)
    offsets = np.cumsum([0] + batch_sizes)
    for client in range(len(batch_sizes)):
        chunk = xr[offsets[client]:offsets[client + 1]]
        expect = (ref_linear(chunk, w2, b2r)
                  if client in g3_participants else chunk)
        np.testing.assert_allclose(np.asarray(outputs[client]),
                                   np.asarray(expect), rtol=1e-5, atol=1e-5)

    # g3 empty -> single-output kernel variant (layer[-1] matmul + y2
    # writeback skipped entirely).
    outputs_no_g3 = model.forward(x0, x1, g1_participants, g2_participants,
                                  [], batch_sizes)
    for client in range(len(batch_sizes)):
        jax.block_until_ready(outputs_no_g3[client])
        np.testing.assert_allclose(
            np.asarray(outputs_no_g3[client]),
            np.asarray(xr[offsets[client]:offsets[client + 1]]),
            rtol=1e-5, atol=1e-5)

    # forward_c: fused chain (layers 0..1) and single-layer (layer 2) paths.
    yc = model.forward_c(x0, (0, 1))
    jax.block_until_ready(yc)
    np.testing.assert_allclose(
        np.asarray(yc),
        np.asarray(ref_linear(ref_linear(x0, w0, b0r), w1, b1r)),
        rtol=1e-5, atol=1e-5)

    yc2 = model.forward_c(x0, (2, 2))
    jax.block_until_ready(yc2)
    np.testing.assert_allclose(np.asarray(yc2),
                               np.asarray(ref_linear(x0, w2, b2r)),
                               rtol=1e-5, atol=1e-5)

    print("KERNEL_OK")
</pallas_src>

<mosaic_0001>
module attributes {stable_mosaic.version = 11 : i64} {
  func.func @_fused3_y2_kernel(%arg0: memref<16x32xf32, #tpu.memory_space<vmem>>, %arg1: memref<16x32xf32, #tpu.memory_space<vmem>>, %arg2: memref<32x128xf32, #tpu.memory_space<vmem>>, %arg3: memref<1x128xf32, #tpu.memory_space<vmem>>, %arg4: memref<128x128xf32, #tpu.memory_space<vmem>>, %arg5: memref<32x128xf32, #tpu.memory_space<vmem>>, %arg6: memref<1x128xf32, #tpu.memory_space<vmem>>, %arg7: memref<128x128xf32, #tpu.memory_space<vmem>>, %arg8: memref<1x128xf32, #tpu.memory_space<vmem>>, %arg9: memref<32x128xf32, #tpu.memory_space<vmem>>, %arg10: memref<32x128xf32, #tpu.memory_space<vmem>>) attributes {dimension_semantics = [], scalar_prefetch = 0 : i64, scratch_operands = 0 : i64, tpu.core_type = #tpu.core_type<tc>} {
    %c0 = arith.constant 0 : index
    %c0_0 = arith.constant 0 : index
    %0 = vector.load %arg0[%c0, %c0_0] : memref<16x32xf32, #tpu.memory_space<vmem>>, vector<16x32xf32>
    %c0_1 = arith.constant 0 : index
    %c0_2 = arith.constant 0 : index
    %1 = vector.load %arg2[%c0_1, %c0_2] : memref<32x128xf32, #tpu.memory_space<vmem>>, vector<32x128xf32>
    %cst = arith.constant dense<0.000000e+00> : vector<16x128xf32>
    %2 = tpu.matmul %0, %1, %cst {dimension_numbers = #tpu.dot_dimension_numbers<[1], [0], [0], [1], [0, 0, 1, 1], [], []>, precision = #tpu.contract_precision<fp32>} : vector<16x32xf32>, vector<32x128xf32>, vector<16x128xf32> -> vector<16x128xf32>
    %c0_3 = arith.constant 0 : index
    %c0_4 = arith.constant 0 : index
    %3 = vector.load %arg3[%c0_3, %c0_4] : memref<1x128xf32, #tpu.memory_space<vmem>>, vector<1x128xf32>
    %4 = vector.broadcast %3 : vector<1x128xf32> to vector<16x128xf32>
    %5 = arith.addf %2, %4 : vector<16x128xf32>
    %c0_5 = arith.constant 0 : index
    %c0_6 = arith.constant 0 : index
    %6 = vector.load %arg4[%c0_5, %c0_6] : memref<128x128xf32, #tpu.memory_space<vmem>>, vector<128x128xf32>
    %cst_7 = arith.constant dense<0.000000e+00> : vector<16x128xf32>
    %7 = tpu.matmul %5, %6, %cst_7 {dimension_numbers = #tpu.dot_dimension_numbers<[1], [0], [0], [1], [0, 0, 1, 1], [], []>, precision = #tpu.contract_precision<fp32>} : vector<16x128xf32>, vector<128x128xf32>, vector<16x128xf32> -> vector<16x128xf32>
    %c0_8 = arith.constant 0 : index
    %c0_9 = arith.constant 0 : index
    %8 = vector.load %arg6[%c0_8, %c0_9] : memref<1x128xf32, #tpu.memory_space<vmem>>, vector<1x128xf32>
    %9 = vector.broadcast %8 : vector<1x128xf32> to vector<16x128xf32>
    %10 = arith.addf %7, %9 : vector<16x128xf32>
    %c0_10 = arith.constant 0 : index
    %c0_11 = arith.constant 0 : index
    %11 = vector.load %arg1[%c0_10, %c0_11] : memref<16x32xf32, #tpu.memory_space<vmem>>, vector<16x32xf32>
    %c0_12 = arith.constant 0 : index
    %c0_13 = arith.constant 0 : index
    %12 = vector.load %arg5[%c0_12, %c0_13] : memref<32x128xf32, #tpu.memory_space<vmem>>, vector<32x128xf32>
    %cst_14 = arith.constant dense<0.000000e+00> : vector<16x128xf32>
    %13 = tpu.matmul %11, %12, %cst_14 {dimension_numbers = #tpu.dot_dimension_numbers<[1], [0], [0], [1], [0, 0, 1, 1], [], []>, precision = #tpu.contract_precision<fp32>} : vector<16x32xf32>, vector<32x128xf32>, vector<16x128xf32> -> vector<16x128xf32>
    %c0_15 = arith.constant 0 : index
    %c0_16 = arith.constant 0 : index
    %14 = vector.load %arg6[%c0_15, %c0_16] : memref<1x128xf32, #tpu.memory_space<vmem>>, vector<1x128xf32>
    %15 = vector.broadcast %14 : vector<1x128xf32> to vector<16x128xf32>
    %16 = arith.addf %13, %15 : vector<16x128xf32>
    %c0_17 = arith.constant 0 : index
    %c0_18 = arith.constant 0 : index
    %17 = vector.load %arg9[%c0_17, %c0_18] : memref<32x128xf32, #tpu.memory_space<vmem>>, vector<16x128xf32>
    tpu.vector_store %arg9[%c0_17, %c0_18], %10 {strides = array<i32>} : memref<32x128xf32, #tpu.memory_space<vmem>>, vector<16x128xf32>,
    %c16 = arith.constant 16 : index
    %c0_19 = arith.constant 0 : index
    %18 = vector.load %arg9[%c16, %c0_19] : memref<32x128xf32, #tpu.memory_space<vmem>>, vector<16x128xf32>
    tpu.vector_store %arg9[%c16, %c0_19], %16 {strides = array<i32>} : memref<32x128xf32, #tpu.memory_space<vmem>>, vector<16x128xf32>,
    %c0_20 = arith.constant 0 : index
    %c0_21 = arith.constant 0 : index
    %19 = vector.load %arg7[%c0_20, %c0_21] : memref<128x128xf32, #tpu.memory_space<vmem>>, vector<128x128xf32>
    %cst_22 = arith.constant dense<0.000000e+00> : vector<16x128xf32>
    %20 = tpu.matmul %10, %19, %cst_22 {dimension_numbers = #tpu.dot_dimension_numbers<[1], [0], [0], [1], [0, 0, 1, 1], [], []>, precision = #tpu.contract_precision<fp32>} : vector<16x128xf32>, vector<128x128xf32>, vector<16x128xf32> -> vector<16x128xf32>
    %c0_23 = arith.constant 0 : index
    %c0_24 = arith.constant 0 : index
    %21 = vector.load %arg8[%c0_23, %c0_24] : memref<1x128xf32, #tpu.memory_space<vmem>>, vector<1x128xf32>
    %22 = vector.broadcast %21 : vector<1x128xf32> to vector<16x128xf32>
    %23 = arith.addf %20, %22 : vector<16x128xf32>
    %c0_25 = arith.constant 0 : index
    %c0_26 = arith.constant 0 : index
    %24 = vector.load %arg10[%c0_25, %c0_26] : memref<32x128xf32, #tpu.memory_space<vmem>>, vector<16x128xf32>
    tpu.vector_store %arg10[%c0_25, %c0_26], %23 {strides = array<i32>} : memref<32x128xf32, #tpu.memory_space<vmem>>, vector<16x128xf32>,
    %c0_27 = arith.constant 0 : index
    %c0_28 = arith.constant 0 : index
    %25 = vector.load %arg7[%c0_27, %c0_28] : memref<128x128xf32, #tpu.memory_space<vmem>>, vector<128x128xf32>
    %cst_29 = arith.constant dense<0.000000e+00> : vector<16x128xf32>
    %26 = tpu.matmul %16, %25, %cst_29 {dimension_numbers = #tpu.dot_dimension_numbers<[1], [0], [0], [1], [0, 0, 1, 1], [], []>, precision = #tpu.contract_precision<fp32>} : vector<16x128xf32>, vector<128x128xf32>, vector<16x128xf32> -> vector<16x128xf32>
    %c0_30 = arith.constant 0 : index
    %c0_31 = arith.constant 0 : index
    %27 = vector.load %arg8[%c0_30, %c0_31] : memref<1x128xf32, #tpu.memory_space<vmem>>, vector<1x128xf32>
    %28 = vector.broadcast %27 : vector<1x128xf32> to vector<16x128xf32>
    %29 = arith.addf %26, %28 : vector<16x128xf32>
    %c16_32 = arith.constant 16 : index
    %c0_33 = arith.constant 0 : index
    %30 = vector.load %arg10[%c16_32, %c0_33] : memref<32x128xf32, #tpu.memory_space<vmem>>, vector<16x128xf32>
    tpu.vector_store %arg10[%c16_32, %c0_33], %29 {strides = array<i32>} : memref<32x128xf32, #tpu.memory_space<vmem>>, vector<16x128xf32>,
    return
  }
}

</mosaic_0001>

<llo_original>
// kernel: _forward3_routed.1
$region0: #{_forward3_routed.1}
  #allocation0 [shape = 'u32[]', space=smem, size = 0x4, offset = 0x4, fixed_abs, tag = 'smem constant byte address 0x4 - core index']
  #allocation1 [shape = 'u32[72,128]{1,0:T(1,128)}', space=vmem, size = 0x9000, scoped, tag = 'internal scratch']
  %s0 = inlined_call_operand.hbm [shape: f32[16,32], index: 0, kind: input, shape index: {}]
  %s1 = inlined_call_operand.hbm [shape: f32[16,32], index: 1, kind: input, shape index: {}]
  %s2 = inlined_call_operand.hbm [shape: f32[32,128], index: 2, kind: input, shape index: {}]
  %s3 = inlined_call_operand.vmem [shape: f32[1,128], index: 3, kind: input, shape index: {}]
  %s4 = inlined_call_operand.hbm [shape: f32[128,128], index: 4, kind: input, shape index: {}]
  %s5 = inlined_call_operand.hbm [shape: f32[32,128], index: 5, kind: input, shape index: {}]
  %s6 = inlined_call_operand.vmem [shape: f32[1,128], index: 6, kind: input, shape index: {}]
  %s7 = inlined_call_operand.hbm [shape: f32[128,128], index: 7, kind: input, shape index: {}]
  %s8 = inlined_call_operand.vmem [shape: f32[1,128], index: 8, kind: input, shape index: {}]
  %s9 = inlined_call_operand.vmem [shape: f32[32,128], index: 9, kind: output, shape index: {0}]
  %s10 = inlined_call_operand.vmem [shape: f32[32,128], index: 10, kind: output, shape index: {1}]
  %11 = xla_tuple %s9, %s10
  %s12 = sld [smem:[#allocation0]]
  $region78: #{_forward3_routed.1} parent=0
    _
  %s14 = ssub.s32 1, %s12
  %s15 = scalar_select 0, %s14, %s12
  $region1: #{_forward3_routed.1} parent=0
    #allocation2 [shape = 'u8[8192]{0}', space=vmem, size = 0x2000, scoped, tag = 'input window, operand 0, single buffered']
    #allocation3 [shape = 's32[1]{0}', space=sflag, size = 0x4, scoped, tag = 'scoped memory for _forward3_routed.1']
    #allocation4 [shape = 'u8[8192]{0}', space=vmem, size = 0x2000, scoped, tag = 'input window, operand 1, single buffered']
    #allocation5 [shape = 's32[1]{0}', space=sflag, size = 0x4, scoped, tag = 'scoped memory for _forward3_routed.1']
    #allocation6 [shape = 'u8[16384]{0}', space=vmem, size = 0x4000, scoped, tag = 'input window, operand 2, single buffered']
    #allocation7 [shape = 'u8[65536]{0}', space=vmem, size = 0x10000, scoped, tag = 'input window, operand 4, single buffered']
    #allocation8 [shape = 's32[1]{0}', space=sflag, size = 0x4, scoped, tag = 'scoped memory for _forward3_routed.1']
    #allocation9 [shape = 'u8[16384]{0}', space=vmem, size = 0x4000, scoped, tag = 'input window, operand 5, single buffered']
    #allocation10 [shape = 'u8[65536]{0}', space=vmem, size = 0x10000, scoped, tag = 'input window, operand 7, single buffered']
    #allocation11 [shape = 's32[1]{0}', space=sflag, size = 0x4, scoped, tag = 'scoped memory for _forward3_routed.1']
    %16 = vsyncpa [#allocation3], 0
    %17 = vsyncpa [#allocation5], 0
    %18 = vsyncpa [#allocation8], 0
    %19 = vsyncpa [#allocation11], 0
    // Predicated region
    $region2: #{_forward3_routed.1} parent=1 // pred_check
      _
    $region3: #{_forward3_routed.1} parent=1 // pred_check_branch
      %21 = sbr.rel (0) target = $region5
    $region4: #{_forward3_routed.1} parent=1 // pred_region
      %23 = vsyncadd [#allocation3], 0
      %s24 = sshll.u32 %s0, 4
      %s25 = int_to_ptr.hbm [resolvable:$true] %s24
      %s26 = sshll.u32 [#allocation2], 4
      %s27 = int_to_ptr.vmem [resolvable:$true] %s26
      %32 = dma.hbm_to_vmem [thread:$0]  %s25, 256, %s27, [#allocation3], 128, 128, 8
    $region5: #{_forward3_routed.1} parent=1 // pred_fallthru
      _
    // Predicated region
    $region6: #{_forward3_routed.1} parent=1 // pred_check
      _
    $region7: #{_forward3_routed.1} parent=1 // pred_check_branch
      %34 = sbr.rel (0) target = $region9
    $region8: #{_forward3_routed.1} parent=1 // pred_region
      %36 = vsyncadd [#allocation5], 0
      %s37 = sshll.u32 %s1, 4
      %s38 = int_to_ptr.hbm [resolvable:$true] %s37
      %s39 = sshll.u32 [#allocation4], 4
      %s40 = int_to_ptr.vmem [resolvable:$true] %s39
      %45 = dma.hbm_to_vmem [thread:$0]  %s38, 256, %s40, [#allocation5], 128, 128, 8
    $region9: #{_forward3_routed.1} parent=1 // pred_fallthru
      _
    // Predicated region
    $region10: #{_forward3_routed.1} parent=1 // pred_check
      _
    $region11: #{_forward3_routed.1} parent=1 // pred_check_branch
      %47 = sbr.rel (0) target = $region13
    $region12: #{_forward3_routed.1} parent=1 // pred_region
      %49 = vsyncadd [#allocation5], 0
      %s50 = sshll.u32 %s2, 4
      %s51 = int_to_ptr.hbm [resolvable:$true] %s50
      %s52 = sshll.u32 [#allocation6], 4
      %s53 = int_to_ptr.vmem [resolvable:$true] %s52
      %58 = dma.hbm_to_vmem [thread:$0]  %s51, 512, %s53, [#allocation5], 128, 128, 8
    $region13: #{_forward3_routed.1} parent=1 // pred_fallthru
      _
    // Predicated region
    $region14: #{_forward3_routed.1} parent=1 // pred_check
      _
    $region15: #{_forward3_routed.1} parent=1 // pred_check_branch
      %60 = sbr.rel (0) target = $region17
    $region16: #{_forward3_routed.1} parent=1 // pred_region
      _
    $region17: #{_forward3_routed.1} parent=1 // pred_fallthru
      _
    // Predicated region
    $region18: #{_forward3_routed.1} parent=1 // pred_check
      _
    $region19: #{_forward3_routed.1} parent=1 // pred_check_branch
      %62 = sbr.rel (0) target = $region21
    $region20: #{_forward3_routed.1} parent=1 // pred_region
      %64 = vsyncadd [#allocation8], 0
      %s65 = sshll.u32 %s4, 4
      %s66 = int_to_ptr.hbm [resolvable:$true] %s65
      %s67 = sshll.u32 [#allocation7], 4
      %s68 = int_to_ptr.vmem [resolvable:$true] %s67
      %73 = dma.hbm_to_vmem [thread:$0]  %s66, 2048, %s68, [#allocation8], 128, 128, 8
    $region21: #{_forward3_routed.1} parent=1 // pred_fallthru
      _
    // Predicated region
    $region22: #{_forward3_routed.1} parent=1 // pred_check
      _
    $region23: #{_forward3_routed.1} parent=1 // pred_check_branch
      %75 = sbr.rel (0) target = $region25
    $region24: #{_forward3_routed.1} parent=1 // pred_region
      %77 = vsyncadd [#allocation8], 0
      %s78 = sshll.u32 %s5, 4
      %s79 = int_to_ptr.hbm [resolvable:$true] %s78
      %s80 = sshll.u32 [#allocation9], 4
      %s81 = int_to_ptr.vmem [resolvable:$true] %s80
      %86 = dma.hbm_to_vmem [thread:$0]  %s79, 512, %s81, [#allocation8], 128, 128, 8
    $region25: #{_forward3_routed.1} parent=1 // pred_fallthru
      _
    // Predicated region
    $region26: #{_forward3_routed.1} parent=1 // pred_check
      _
    $region27: #{_forward3_routed.1} parent=1 // pred_check_branch
      %88 = sbr.rel (0) target = $region29
    $region28: #{_forward3_routed.1} parent=1 // pred_region
      _
    $region29: #{_forward3_routed.1} parent=1 // pred_fallthru
      _
    // Predicated region
    $region30: #{_forward3_routed.1} parent=1 // pred_check
      _
    $region31: #{_forward3_routed.1} parent=1 // pred_check_branch
      %90 = sbr.rel (0) target = $region33
    $region32: #{_forward3_routed.1} parent=1 // pred_region
      %92 = vsyncadd [#allocation11], 0
      %s93 = sshll.u32 %s7, 4
      %s94 = int_to_ptr.hbm [resolvable:$true] %s93
      %s95 = sshll.u32 [#allocation10], 4
      %s96 = int_to_ptr.vmem [resolvable:$true] %s95
      %101 = dma.hbm_to_vmem [thread:$0]  %s94, 2048, %s96, [#allocation11], 128, 128, 8
    $region33: #{_forward3_routed.1} parent=1 // pred_fallthru
      _
    // Predicated region
    $region34: #{_forward3_routed.1} parent=1 // pred_check
      _
    $region35: #{_forward3_routed.1} parent=1 // pred_check_branch
      %103 = sbr.rel (0) target = $region37
    $region36: #{_forward3_routed.1} parent=1 // pred_region
      _
    $region37: #{_forward3_routed.1} parent=1 // pred_fallthru
      _
    // Predicated region
    $region38: #{_forward3_routed.1} parent=1 // pred_check
      _
    $region39: #{_forward3_routed.1} parent=1 // pred_check_branch
      %105 = sbr.rel (0) target = $region41
    $region40: #{_forward3_routed.1} parent=1 // pred_region
      %107 = dma.done [#allocation3], 256
    $region41: #{_forward3_routed.1} parent=1 // pred_fallthru
      _
    // Predicated region
    $region42: #{_forward3_routed.1} parent=1 // pred_check
      _
    $region43: #{_forward3_routed.1} parent=1 // pred_check_branch
      %109 = sbr.rel (0) target = $region45
    $region44: #{_forward3_routed.1} parent=1 // pred_region
      %111 = dma.done [#allocation5], 256
    $region45: #{_forward3_routed.1} parent=1 // pred_fallthru
      _
    // Predicated region
    $region46: #{_forward3_routed.1} parent=1 // pred_check
      _
    $region47: #{_forward3_routed.1} parent=1 // pred_check_branch
      %113 = sbr.rel (0) target = $region49
    $region48: #{_forward3_routed.1} parent=1 // pred_region
      %115 = dma.done [#allocation5], 512
    $region49: #{_forward3_routed.1} parent=1 // pred_fallthru
      _
    // Predicated region
    $region50: #{_forward3_routed.1} parent=1 // pred_check
      _
    $region51: #{_forward3_routed.1} parent=1 // pred_check_branch
      %117 = sbr.rel (0) target = $region53
    $region52: #{_forward3_routed.1} parent=1 // pred_region
      %119 = dma.done [#allocation8], 2048
    $region53: #{_forward3_routed.1} parent=1 // pred_fallthru
      _
    // Predicated region
    $region54: #{_forward3_routed.1} parent=1 // pred_check
      _
    $region55: #{_forward3_routed.1} parent=1 // pred_check_branch
      %121 = sbr.rel (0) target = $region57
    $region56: #{_forward3_routed.1} parent=1 // pred_region
      %123 = dma.done [#allocation8], 512
    $region57: #{_forward3_routed.1} parent=1 // pred_fallthru
      _
    // Predicated region
    $region58: #{_forward3_routed.1} parent=1 // pred_check
      _
    $region59: #{_forward3_routed.1} parent=1 // pred_check_branch
      %125 = sbr.rel (0) target = $region61
    $region60: #{_forward3_routed.1} parent=1 // pred_region
      %127 = dma.done [#allocation11], 2048
    $region61: #{_forward3_routed.1} parent=1 // pred_fallthru
      _
    %v128 = vld [vmem:[#allocation2] sm:$0xff]
    %v129 = vld [vmem:[#allocation2 + $0x8] sm:$0xff]
    %v130 = vld [vmem:[#allocation6] sm:$0xff]
    %v131 = vld [vmem:[#allocation6 + $0x8] sm:$0xff]
    %v132 = vld [vmem:[#allocation6 + $0x10] sm:$0xff]
    %v133 = vld [vmem:[#allocation6 + $0x18] sm:$0xff]
    %v134 = vld [vmem:[%s3] sm:$0x1]
    %v136 = vperm.slane %v134, 0
    %vm138 = vcmask 261120
    %v140 = vsel %vm138, %v128, 0
    %v143 = vsel %vm138, %v129, 0
    %145 = vmatpush.msra.mxu0 0.0
    %146 = vmatpush.msra.mxu0 0.0
    %147 = vmatpush.msra.mxu0 0.0
    %148 = vmatpush.msra.mxu0 0.0
    %149 = vmatpush.msra.mxu0 0.0
    %150 = vmatpush.msra.mxu0 0.0
    %151 = vmatpush.msra.mxu0 0.0
    %152 = vmatpush.msra.mxu0 0.0
    %153 = vmatpush.msra.mxu0 0.0
    %154 = vmatpush.msra.mxu0 0.0
    %155 = vmatpush.msra.mxu0 0.0
    %156 = vmatpush.msra.mxu0 0.0
    %v157 = vand.u32 %v133, 4294901760
    %158 = vmatpush.msra.mxu0 %v157
    %v159 = vand.u32 %v132, 4294901760
    %160 = vmatpush.msra.mxu0 %v159
    %v161 = vand.u32 %v131, 4294901760
    %162 = vmatpush.msra.mxu0 %v161
    %v163 = vand.u32 %v130, 4294901760
    %164 = vmatpush.msra.mxu0 %v163
    %v165 = vand.u32 %v140, 4294901760
    %v166 = vsub.f32 %v140, %v165
    %v167 = vand.u32 %v166, 4294901760
    %v168 = vsub.f32 %v166, %v167
    %v169 = vand.u32 %v168, 4294901760
    %170 = vmatmul.f32.gmra.mxu0 %v169
    %v171 = vpop.f32.mrf.mxu0
    %v172 = vadd.f32 %v136, %v171
    %v173 = vand.u32 %v143, 4294901760
    %v174 = vsub.f32 %v143, %v173
    %v175 = vand.u32 %v174, 4294901760
    %v176 = vsub.f32 %v174, %v175
    %v177 = vand.u32 %v176, 4294901760
    %178 = vmatmul.f32.gmra.mxu0 %v177
    %v179 = vpop.f32.mrf.mxu0
    %v180 = vadd.f32 %v136, %v179
    %181 = vdwg.mxu0
    %182 = vmatpush.msra.mxu0 0.0
    %183 = vmatpush.msra.mxu0 0.0
    %184 = vmatpush.msra.mxu0 0.0
    %185 = vmatpush.msra.mxu0 0.0
    %186 = vmatpush.msra.mxu0 0.0
    %187 = vmatpush.msra.mxu0 0.0
    %188 = vmatpush.msra.mxu0 0.0
    %189 = vmatpush.msra.mxu0 0.0
    %190 = vmatpush.msra.mxu0 0.0
    %191 = vmatpush.msra.mxu0 0.0
    %192 = vmatpush.msra.mxu0 0.0
    %193 = vmatpush.msra.mxu0 0.0
    %v194 = vand.u32 %v133, 4294901760
    %v195 = vsub.f32 %v133, %v194
    %v196 = vand.u32 %v195, 4294901760
    %v197 = vsub.f32 %v195, %v196
    %v198 = vand.u32 %v197, 4294901760
    %199 = vmatpush.msra.mxu0 %v198
    %v200 = vand.u32 %v132, 4294901760
    %v201 = vsub.f32 %v132, %v200
    %v202 = vand.u32 %v201, 4294901760
    %v203 = vsub.f32 %v201, %v202
    %v204 = vand.u32 %v203, 4294901760
    %205 = vmatpush.msra.mxu0 %v204
    %v206 = vand.u32 %v131, 4294901760
    %v207 = vsub.f32 %v131, %v206
    %v208 = vand.u32 %v207, 4294901760
    %v209 = vsub.f32 %v207, %v208
    %v210 = vand.u32 %v209, 4294901760
    %211 = vmatpush.msra.mxu0 %v210
    %v212 = vand.u32 %v130, 4294901760
    %v213 = vsub.f32 %v130, %v212
    %v214 = vand.u32 %v213, 4294901760
    %v215 = vsub.f32 %v213, %v214
    %v216 = vand.u32 %v215, 4294901760
    %217 = vmatpush.msra.mxu0 %v216
    %v218 = vand.u32 %v140, 4294901760
    %219 = vmatmul.f32.gmra.mxu0 %v218
    %v220 = vpop.f32.mrf.mxu0
    %v221 = vadd.f32 %v172, %v220
    %v222 = vand.u32 %v143, 4294901760
    %223 = vmatmul.f32.gmra.mxu0 %v222
    %v224 = vpop.f32.mrf.mxu0
    %v225 = vadd.f32 %v180, %v224
    %226 = vdwg.mxu0
    %227 = vmatpush.msra.mxu0 0.0
    %228 = vmatpush.msra.mxu0 0.0
    %229 = vmatpush.msra.mxu0 0.0
    %230 = vmatpush.msra.mxu0 0.0
    %231 = vmatpush.msra.mxu0 0.0
    %232 = vmatpush.msra.mxu0 0.0
    %233 = vmatpush.msra.mxu0 0.0
    %234 = vmatpush.msra.mxu0 0.0
    %235 = vmatpush.msra.mxu0 0.0
    %236 = vmatpush.msra.mxu0 0.0
    %237 = vmatpush.msra.mxu0 0.0
    %238 = vmatpush.msra.mxu0 0.0
    %v239 = vand.u32 %v133, 4294901760
    %v240 = vsub.f32 %v133, %v239
    %241 = vmatpush.msra.mxu0 %v240
    %v242 = vand.u32 %v132, 4294901760
    %v243 = vsub.f32 %v132, %v242
    %244 = vmatpush.msra.mxu0 %v243
    %v245 = vand.u32 %v131, 4294901760
    %v246 = vsub.f32 %v131, %v245
    %247 = vmatpush.msra.mxu0 %v246
    %v248 = vand.u32 %v130, 4294901760
    %v249 = vsub.f32 %v130, %v248
    %250 = vmatpush.msra.mxu0 %v249
    %v251 = vand.u32 %v140, 4294901760
    %v252 = vsub.f32 %v140, %v251
    %253 = vmatmul.f32.gmra.mxu0 %v252
    %v254 = vpop.f32.mrf.mxu0
    %v255 = vadd.f32 %v221, %v254
    %v256 = vand.u32 %v143, 4294901760
    %v257 = vsub.f32 %v143, %v256
    %258 = vmatmul.f32.gmra.mxu0 %v257
    %v259 = vpop.f32.mrf.mxu0
    %v260 = vadd.f32 %v225, %v259
    %261 = vdwg.mxu0
    %262 = vmatpush.msra.mxu0 0.0
    %263 = vmatpush.msra.mxu0 0.0
    %264 = vmatpush.msra.mxu0 0.0
    %265 = vmatpush.msra.mxu0 0.0
    %266 = vmatpush.msra.mxu0 0.0
    %267 = vmatpush.msra.mxu0 0.0
    %268 = vmatpush.msra.mxu0 0.0
    %269 = vmatpush.msra.mxu0 0.0
    %270 = vmatpush.msra.mxu0 0.0
    %271 = vmatpush.msra.mxu0 0.0
    %272 = vmatpush.msra.mxu0 0.0
    %273 = vmatpush.msra.mxu0 0.0
    %v274 = vand.u32 %v133, 4294901760
    %275 = vmatpush.msra.mxu0 %v274
    %v276 = vand.u32 %v132, 4294901760
    %277 = vmatpush.msra.mxu0 %v276
    %v278 = vand.u32 %v131, 4294901760
    %279 = vmatpush.msra.mxu0 %v278
    %v280 = vand.u32 %v130, 4294901760
    %281 = vmatpush.msra.mxu0 %v280
    %v282 = vand.u32 %v140, 4294901760
    %v283 = vsub.f32 %v140, %v282
    %v284 = vand.u32 %v283, 4294901760
    %285 = vmatmul.f32.gmra.mxu0 %v284
    %v286 = vpop.f32.mrf.mxu0
    %v287 = vadd.f32 %v255, %v286
    %v288 = vand.u32 %v143, 4294901760
    %v289 = vsub.f32 %v143, %v288
    %v290 = vand.u32 %v289, 4294901760
    %291 = vmatmul.f32.gmra.mxu0 %v290
    %v292 = vpop.f32.mrf.mxu0
    %v293 = vadd.f32 %v260, %v292
    %294 = vdwg.mxu0
    %295 = vmatpush.msra.mxu0 0.0
    %296 = vmatpush.msra.mxu0 0.0
    %297 = vmatpush.msra.mxu0 0.0
    %298 = vmatpush.msra.mxu0 0.0
    %299 = vmatpush.msra.mxu0 0.0
    %300 = vmatpush.msra.mxu0 0.0
    %301 = vmatpush.msra.mxu0 0.0
    %302 = vmatpush.msra.mxu0 0.0
    %303 = vmatpush.msra.mxu0 0.0
    %304 = vmatpush.msra.mxu0 0.0
    %305 = vmatpush.msra.mxu0 0.0
    %306 = vmatpush.msra.mxu0 0.0
    %v307 = vand.u32 %v133, 4294901760
    %v308 = vsub.f32 %v133, %v307
    %v309 = vand.u32 %v308, 4294901760
    %310 = vmatpush.msra.mxu0 %v309
    %v311 = vand.u32 %v132, 4294901760
    %v312 = vsub.f32 %v132, %v311
    %v313 = vand.u32 %v312, 4294901760
    %314 = vmatpush.msra.mxu0 %v313
    %v315 = vand.u32 %v131, 4294901760
    %v316 = vsub.f32 %v131, %v315
    %v317 = vand.u32 %v316, 4294901760
    %318 = vmatpush.msra.mxu0 %v317
    %v319 = vand.u32 %v130, 4294901760
    %v320 = vsub.f32 %v130, %v319
    %v321 = vand.u32 %v320, 4294901760
    %322 = vmatpush.msra.mxu0 %v321
    %v323 = vand.u32 %v140, 4294901760
    %324 = vmatmul.f32.gmra.mxu0 %v323
    %v325 = vpop.f32.mrf.mxu0
    %v326 = vadd.f32 %v287, %v325
    %v327 = vand.u32 %v143, 4294901760
    %328 = vmatmul.f32.gmra.mxu0 %v327
    %v329 = vpop.f32.mrf.mxu0
    %v330 = vadd.f32 %v293, %v329
    %331 = vdwg.mxu0
    %332 = vmatpush.msra.mxu0 0.0
    %333 = vmatpush.msra.mxu0 0.0
    %334 = vmatpush.msra.mxu0 0.0
    %335 = vmatpush.msra.mxu0 0.0
    %336 = vmatpush.msra.mxu0 0.0
    %337 = vmatpush.msra.mxu0 0.0
    %338 = vmatpush.msra.mxu0 0.0
    %339 = vmatpush.msra.mxu0 0.0
    %340 = vmatpush.msra.mxu0 0.0
    %341 = vmatpush.msra.mxu0 0.0
    %342 = vmatpush.msra.mxu0 0.0
    %343 = vmatpush.msra.mxu0 0.0
    %v344 = vand.u32 %v133, 4294901760
    %345 = vmatpush.msra.mxu0 %v344
    %v346 = vand.u32 %v132, 4294901760
    %347 = vmatpush.msra.mxu0 %v346
    %v348 = vand.u32 %v131, 4294901760
    %349 = vmatpush.msra.mxu0 %v348
    %v350 = vand.u32 %v130, 4294901760
    %351 = vmatpush.msra.mxu0 %v350
    %v352 = vand.u32 %v140, 4294901760
    %353 = vmatmul.f32.gmra.mxu0 %v352
    %v354 = vpop.f32.mrf.mxu0
    %v355 = vadd.f32 %v326, %v354
    %v356 = vand.u32 %v143, 4294901760
    %357 = vmatmul.f32.gmra.mxu0 %v356
    %v358 = vpop.f32.mrf.mxu0
    %v359 = vadd.f32 %v330, %v358
    %360 = vdwg.mxu0
    %v361 = vld [vmem:[#allocation7] sm:$0xff]
    %v362 = vld [vmem:[#allocation7 + $0x8] sm:$0xff]
    %v363 = vld [vmem:[#allocation7 + $0x10] sm:$0xff]
    %v364 = vld [vmem:[#allocation7 + $0x18] sm:$0xff]
    %v365 = vld [vmem:[#allocation7 + $0x20] sm:$0xff]
    %v366 = vld [vmem:[#allocation7 + $0x28] sm:$0xff]
    %v367 = vld [vmem:[#allocation7 + $0x30] sm:$0xff]
    %v368 = vld [vmem:[#allocation7 + $0x38] sm:$0xff]
    %v369 = vld [vmem:[#allocation7 + $0x40] sm:$0xff]
    %v370 = vld [vmem:[#allocation7 + $0x48] sm:$0xff]
    %v371 = vld [vmem:[#allocation7 + $0x50] sm:$0xff]
    %v372 = vld [vmem:[#allocation7 + $0x58] sm:$0xff]
    %v373 = vld [vmem:[#allocation7 + $0x60] sm:$0xff]
    %v374 = vld [vmem:[#allocation7 + $0x68] sm:$0xff]
    %v375 = vld [vmem:[#allocation7 + $0x70] sm:$0xff]
    %v376 = vld [vmem:[#allocation7 + $0x78] sm:$0xff]
    %v377 = vld [vmem:[%s6] sm:$0x1]
    %v379 = vperm.slane %v377, 0
    %v381 = vand.u32 %v376, 4294901760
    %382 = vmatpush.msra.mxu0 %v381
    %v383 = vand.u32 %v375, 4294901760
    %384 = vmatpush.msra.mxu0 %v383
    %v385 = vand.u32 %v374, 4294901760
    %386 = vmatpush.msra.mxu0 %v385
    %v387 = vand.u32 %v373, 4294901760
    %388 = vmatpush.msra.mxu0 %v387
    %v389 = vand.u32 %v372, 4294901760
    %390 = vmatpush.msra.mxu0 %v389
    %v391 = vand.u32 %v371, 4294901760
    %392 = vmatpush.msra.mxu0 %v391
    %v393 = vand.u32 %v370, 4294901760
    %394 = vmatpush.msra.mxu0 %v393
    %v395 = vand.u32 %v369, 4294901760
    %396 = vmatpush.msra.mxu0 %v395
    %v397 = vand.u32 %v368, 4294901760
    %398 = vmatpush.msra.mxu0 %v397
    %v399 = vand.u32 %v367, 4294901760
    %400 = vmatpush.msra.mxu0 %v399
    %v401 = vand.u32 %v366, 4294901760
    %402 = vmatpush.msra.mxu0 %v401
    %v403 = vand.u32 %v365, 4294901760
    %404 = vmatpush.msra.mxu0 %v403
    %v405 = vand.u32 %v364, 4294901760
    %406 = vmatpush.msra.mxu0 %v405
    %v407 = vand.u32 %v363, 4294901760
    %408 = vmatpush.msra.mxu0 %v407
    %v409 = vand.u32 %v362, 4294901760
    %410 = vmatpush.msra.mxu0 %v409
    %v411 = vand.u32 %v361, 4294901760
    %412 = vmatpush.msra.mxu0 %v411
    %v413 = vand.u32 %v355, 4294901760
    %v414 = vsub.f32 %v355, %v413
    %v415 = vand.u32 %v414, 4294901760
    %v416 = vsub.f32 %v414, %v415
    %v417 = vand.u32 %v416, 4294901760
    %418 = vmatmul.f32.gmra.mxu0 %v417
    %v419 = vpop.f32.mrf.mxu0
    %v420 = vadd.f32 %v379, %v419
    %v421 = vand.u32 %v359, 4294901760
    %v422 = vsub.f32 %v359, %v421
    %v423 = vand.u32 %v422, 4294901760
    %v424 = vsub.f32 %v422, %v423
    %v425 = vand.u32 %v424, 4294901760
    %426 = vmatmul.f32.gmra.mxu0 %v425
    %v427 = vpop.f32.mrf.mxu0
    %v428 = vadd.f32 %v379, %v427
    %429 = vdwg.mxu0
    %v430 = vand.u32 %v376, 4294901760
    %v431 = vsub.f32 %v376, %v430
    %v432 = vand.u32 %v431, 4294901760
    %v433 = vsub.f32 %v431, %v432
    %v434 = vand.u32 %v433, 4294901760
    %435 = vmatpush.msra.mxu0 %v434
    %v436 = vand.u32 %v375, 4294901760
    %v437 = vsub.f32 %v375, %v436
    %v438 = vand.u32 %v437, 4294901760
    %v439 = vsub.f32 %v437, %v438
    %v440 = vand.u32 %v439, 4294901760
    %441 = vmatpush.msra.mxu0 %v440
    %v442 = vand.u32 %v374, 4294901760
    %v443 = vsub.f32 %v374, %v442
    %v444 = vand.u32 %v443, 4294901760
    %v445 = vsub.f32 %v443, %v444
    %v446 = vand.u32 %v445, 4294901760
    %447 = vmatpush.msra.mxu0 %v446
    %v448 = vand.u32 %v373, 4294901760
    %v449 = vsub.f32 %v373, %v448
    %v450 = vand.u32 %v449, 4294901760
    %v451 = vsub.f32 %v449, %v450
    %v452 = vand.u32 %v451, 4294901760
    %453 = vmatpush.msra.mxu0 %v452
    %v454 = vand.u32 %v372, 4294901760
    %v455 = vsub.f32 %v372, %v454
    %v456 = vand.u32 %v455, 4294901760
    %v457 = vsub.f32 %v455, %v456
    %v458 = vand.u32 %v457, 4294901760
    %459 = vmatpush.msra.mxu0 %v458
    %v460 = vand.u32 %v371, 4294901760
    %v461 = vsub.f32 %v371, %v460
    %v462 = vand.u32 %v461, 4294901760
    %v463 = vsub.f32 %v461, %v462
    %v464 = vand.u32 %v463, 4294901760
    %465 = vmatpush.msra.mxu0 %v464
    %v466 = vand.u32 %v370, 4294901760
    %v467 = vsub.f32 %v370, %v466
    %v468 = vand.u32 %v467, 4294901760
    %v469 = vsub.f32 %v467, %v468
    %v470 = vand.u32 %v469, 4294901760
    %471 = vmatpush.msra.mxu0 %v470
    %v472 = vand.u32 %v369, 4294901760
    %v473 = vsub.f32 %v369, %v472
    %v474 = vand.u32 %v473, 4294901760
    %v475 = vsub.f32 %v473, %v474
    %v476 = vand.u32 %v475, 4294901760
    %477 = vmatpush.msra.mxu0 %v476
    %v478 = vand.u32 %v368, 4294901760
    %v479 = vsub.f32 %v368, %v478
    %v480 = vand.u32 %v479, 4294901760
    %v481 = vsub.f32 %v479, %v480
    %v482 = vand.u32 %v481, 4294901760
    %483 = vmatpush.msra.mxu0 %v482
    %v484 = vand.u32 %v367, 4294901760
    %v485 = vsub.f32 %v367, %v484
    %v486 = vand.u32 %v485, 4294901760
    %v487 = vsub.f32 %v485, %v486
    %v488 = vand.u32 %v487, 4294901760
    %489 = vmatpush.msra.mxu0 %v488
    %v490 = vand.u32 %v366, 4294901760
    %v491 = vsub.f32 %v366, %v490
    %v492 = vand.u32 %v491, 4294901760
    %v493 = vsub.f32 %v491, %v492
    %v494 = vand.u32 %v493, 4294901760
    %495 = vmatpush.msra.mxu0 %v494
    %v496 = vand.u32 %v365, 4294901760
    %v497 = vsub.f32 %v365, %v496
    %v498 = vand.u32 %v497, 4294901760
    %v499 = vsub.f32 %v497, %v498
    %v500 = vand.u32 %v499, 4294901760
    %501 = vmatpush.msra.mxu0 %v500
    %v502 = vand.u32 %v364, 4294901760
    %v503 = vsub.f32 %v364, %v502
    %v504 = vand.u32 %v503, 4294901760
    %v505 = vsub.f32 %v503, %v504
    %v506 = vand.u32 %v505, 4294901760
    %507 = vmatpush.msra.mxu0 %v506
    %v508 = vand.u32 %v363, 4294901760
    %v509 = vsub.f32 %v363, %v508
    %v510 = vand.u32 %v509, 4294901760
    %v511 = vsub.f32 %v509, %v510
    %v512 = vand.u32 %v511, 4294901760
    %513 = vmatpush.msra.mxu0 %v512
    %v514 = vand.u32 %v362, 4294901760
    %v515 = vsub.f32 %v362, %v514
    %v516 = vand.u32 %v515, 4294901760
    %v517 = vsub.f32 %v515, %v516
    %v518 = vand.u32 %v517, 4294901760
    %519 = vmatpush.msra.mxu0 %v518
    %v520 = vand.u32 %v361, 4294901760
    %v521 = vsub.f32 %v361, %v520
    %v522 = vand.u32 %v521, 4294901760
    %v523 = vsub.f32 %v521, %v522
    %v524 = vand.u32 %v523, 4294901760
    %525 = vmatpush.msra.mxu0 %v524
    %v526 = vand.u32 %v355, 4294901760
    %527 = vmatmul.f32.gmra.mxu0 %v526
    %v528 = vpop.f32.mrf.mxu0
    %v529 = vadd.f32 %v420, %v528
    %v530 = vand.u32 %v359, 4294901760
    %531 = vmatmul.f32.gmra.mxu0 %v530
    %v532 = vpop.f32.mrf.mxu0
    %v533 = vadd.f32 %v428, %v532
    %534 = vdwg.mxu0
    %v535 = vand.u32 %v376, 4294901760
    %v536 = vsub.f32 %v376, %v535
    %537 = vmatpush.msra.mxu0 %v536
    %v538 = vand.u32 %v375, 4294901760
    %v539 = vsub.f32 %v375, %v538
    %540 = vmatpush.msra.mxu0 %v539
    %v541 = vand.u32 %v374, 4294901760
    %v542 = vsub.f32 %v374, %v541
    %543 = vmatpush.msra.mxu0 %v542
    %v544 = vand.u32 %v373, 4294901760
    %v545 = vsub.f32 %v373, %v544
    %546 = vmatpush.msra.mxu0 %v545
    %v547 = vand.u32 %v372, 4294901760
    %v548 = vsub.f32 %v372, %v547
    %549 = vmatpush.msra.mxu0 %v548
    %v550 = vand.u32 %v371, 4294901760
    %v551 = vsub.f32 %v371, %v550
    %552 = vmatpush.msra.mxu0 %v551
    %v553 = vand.u32 %v370, 4294901760
    %v554 = vsub.f32 %v370, %v553
    %555 = vmatpush.msra.mxu0 %v554
    %v556 = vand.u32 %v369, 4294901760
    %v557 = vsub.f32 %v369, %v556
    %558 = vmatpush.msra.mxu0 %v557
    %v559 = vand.u32 %v368, 4294901760
    %v560 = vsub.f32 %v368, %v559
    %561 = vmatpush.msra.mxu0 %v560
    %v562 = vand.u32 %v367, 4294901760
    %v563 = vsub.f32 %v367, %v562
    %564 = vmatpush.msra.mxu0 %v563
    %v565 = vand.u32 %v366, 4294901760
    %v566 = vsub.f32 %v366, %v565
    %567 = vmatpush.msra.mxu0 %v566
    %v568 = vand.u32 %v365, 4294901760
    %v569 = vsub.f32 %v365, %v568
    %570 = vmatpush.msra.mxu0 %v569
    %v571 = vand.u32 %v364, 4294901760
    %v572 = vsub.f32 %v364, %v571
    %573 = vmatpush.msra.mxu0 %v572
    %v574 = vand.u32 %v363, 4294901760
    %v575 = vsub.f32 %v363, %v574
    %576 = vmatpush.msra.mxu0 %v575
    %v577 = vand.u32 %v362, 4294901760
    %v578 = vsub.f32 %v362, %v577
    %579 = vmatpush.msra.mxu0 %v578
    %v580 = vand.u32 %v361, 4294901760
    %v581 = vsub.f32 %v361, %v580
    %582 = vmatpush.msra.mxu0 %v581
    %v583 = vand.u32 %v355, 4294901760
    %v584 = vsub.f32 %v355, %v583
    %585 = vmatmul.f32.gmra.mxu0 %v584
    %v586 = vpop.f32.mrf.mxu0
    %v587 = vadd.f32 %v529, %v586
    %v588 = vand.u32 %v359, 4294901760
    %v589 = vsub.f32 %v359, %v588
    %590 = vmatmul.f32.gmra.mxu0 %v589
    %v591 = vpop.f32.mrf.mxu0
    %v592 = vadd.f32 %v533, %v591
    %593 = vdwg.mxu0
    %v594 = vand.u32 %v376, 4294901760
    %595 = vmatpush.msra.mxu0 %v594
    %v596 = vand.u32 %v375, 4294901760
    %597 = vmatpush.msra.mxu0 %v596
    %v598 = vand.u32 %v374, 4294901760
    %599 = vmatpush.msra.mxu0 %v598
    %v600 = vand.u32 %v373, 4294901760
    %601 = vmatpush.msra.mxu0 %v600
    %v602 = vand.u32 %v372, 4294901760
    %603 = vmatpush.msra.mxu0 %v602
    %v604 = vand.u32 %v371, 4294901760
    %605 = vmatpush.msra.mxu0 %v604
    %v606 = vand.u32 %v370, 4294901760
    %607 = vmatpush.msra.mxu0 %v606
    %v608 = vand.u32 %v369, 4294901760
    %609 = vmatpush.msra.mxu0 %v608
    %v610 = vand.u32 %v368, 4294901760
    %611 = vmatpush.msra.mxu0 %v610
    %v612 = vand.u32 %v367, 4294901760
    %613 = vmatpush.msra.mxu0 %v612
    %v614 = vand.u32 %v366, 4294901760
    %615 = vmatpush.msra.mxu0 %v614
    %v616 = vand.u32 %v365, 4294901760
    %617 = vmatpush.msra.mxu0 %v616
    %v618 = vand.u32 %v364, 4294901760
    %619 = vmatpush.msra.mxu0 %v618
    %v620 = vand.u32 %v363, 4294901760
    %621 = vmatpush.msra.mxu0 %v620
    %v622 = vand.u32 %v362, 4294901760
    %623 = vmatpush.msra.mxu0 %v622
    %v624 = vand.u32 %v361, 4294901760
    %625 = vmatpush.msra.mxu0 %v624
    %v626 = vand.u32 %v355, 4294901760
    %v627 = vsub.f32 %v355, %v626
    %v628 = vand.u32 %v627, 4294901760
    %629 = vmatmul.f32.gmra.mxu0 %v628
    %v630 = vpop.f32.mrf.mxu0
    %v631 = vadd.f32 %v587, %v630
    %v632 = vand.u32 %v359, 4294901760
    %v633 = vsub.f32 %v359, %v632
    %v634 = vand.u32 %v633, 4294901760
    %635 = vmatmul.f32.gmra.mxu0 %v634
    %v636 = vpop.f32.mrf.mxu0
    %v637 = vadd.f32 %v592, %v636
    %638 = vdwg.mxu0
    %v639 = vand.u32 %v376, 4294901760
    %v640 = vsub.f32 %v376, %v639
    %v641 = vand.u32 %v640, 4294901760
    %642 = vmatpush.msra.mxu0 %v641
    %v643 = vand.u32 %v375, 4294901760
    %v644 = vsub.f32 %v375, %v643
    %v645 = vand.u32 %v644, 4294901760
    %646 = vmatpush.msra.mxu0 %v645
    %v647 = vand.u32 %v374, 4294901760
    %v648 = vsub.f32 %v374, %v647
    %v649 = vand.u32 %v648, 4294901760
    %650 = vmatpush.msra.mxu0 %v649
    %v651 = vand.u32 %v373, 4294901760
    %v652 = vsub.f32 %v373, %v651
    %v653 = vand.u32 %v652, 4294901760
    %654 = vmatpush.msra.mxu0 %v653
    %v655 = vand.u32 %v372, 4294901760
    %v656 = vsub.f32 %v372, %v655
    %v657 = vand.u32 %v656, 4294901760
    %658 = vmatpush.msra.mxu0 %v657
    %v659 = vand.u32 %v371, 4294901760
    %v660 = vsub.f32 %v371, %v659
    %v661 = vand.u32 %v660, 4294901760
    %662 = vmatpush.msra.mxu0 %v661
    %v663 = vand.u32 %v370, 4294901760
    %v664 = vsub.f32 %v370, %v663
    %v665 = vand.u32 %v664, 4294901760
    %666 = vmatpush.msra.mxu0 %v665
    %v667 = vand.u32 %v369, 4294901760
    %v668 = vsub.f32 %v369, %v667
    %v669 = vand.u32 %v668, 4294901760
    %670 = vmatpush.msra.mxu0 %v669
    %v671 = vand.u32 %v368, 4294901760
    %v672 = vsub.f32 %v368, %v671
    %v673 = vand.u32 %v672, 4294901760
    %674 = vmatpush.msra.mxu0 %v673
    %v675 = vand.u32 %v367, 4294901760
    %v676 = vsub.f32 %v367, %v675
    %v677 = vand.u32 %v676, 4294901760
    %678 = vmatpush.msra.mxu0 %v677
    %v679 = vand.u32 %v366, 4294901760
    %v680 = vsub.f32 %v366, %v679
    %v681 = vand.u32 %v680, 4294901760
    %682 = vmatpush.msra.mxu0 %v681
    %v683 = vand.u32 %v365, 4294901760
    %v684 = vsub.f32 %v365, %v683
    %v685 = vand.u32 %v684, 4294901760
    %686 = vmatpush.msra.mxu0 %v685
    %v687 = vand.u32 %v364, 4294901760
    %v688 = vsub.f32 %v364, %v687
    %v689 = vand.u32 %v688, 4294901760
    %690 = vmatpush.msra.mxu0 %v689
    %v691 = vand.u32 %v363, 4294901760
    %v692 = vsub.f32 %v363, %v691
    %v693 = vand.u32 %v692, 4294901760
    %694 = vmatpush.msra.mxu0 %v693
    %v695 = vand.u32 %v362, 4294901760
    %v696 = vsub.f32 %v362, %v695
    %v697 = vand.u32 %v696, 4294901760
    %698 = vmatpush.msra.mxu0 %v697
    %v699 = vand.u32 %v361, 4294901760
    %v700 = vsub.f32 %v361, %v699
    %v701 = vand.u32 %v700, 4294901760
    %702 = vmatpush.msra.mxu0 %v701
    %v703 = vand.u32 %v355, 4294901760
    %704 = vmatmul.f32.gmra.mxu0 %v703
    %v705 = vpop.f32.mrf.mxu0
    %v706 = vadd.f32 %v631, %v705
    %v707 = vand.u32 %v359, 4294901760
    %708 = vmatmul.f32.gmra.mxu0 %v707
    %v709 = vpop.f32.mrf.mxu0
    %v710 = vadd.f32 %v637, %v709
    %711 = vdwg.mxu0
    %v712 = vand.u32 %v376, 4294901760
    %713 = vmatpush.msra.mxu0 %v712
    %v714 = vand.u32 %v375, 4294901760
    %715 = vmatpush.msra.mxu0 %v714
    %v716 = vand.u32 %v374, 4294901760
    %717 = vmatpush.msra.mxu0 %v716
    %v718 = vand.u32 %v373, 4294901760
    %719 = vmatpush.msra.mxu0 %v718
    %v720 = vand.u32 %v372, 4294901760
    %721 = vmatpush.msra.mxu0 %v720
    %v722 = vand.u32 %v371, 4294901760
    %723 = vmatpush.msra.mxu0 %v722
    %v724 = vand.u32 %v370, 4294901760
    %725 = vmatpush.msra.mxu0 %v724
    %v726 = vand.u32 %v369, 4294901760
    %727 = vmatpush.msra.mxu0 %v726
    %v728 = vand.u32 %v368, 4294901760
    %729 = vmatpush.msra.mxu0 %v728
    %v730 = vand.u32 %v367, 4294901760
    %731 = vmatpush.msra.mxu0 %v730
    %v732 = vand.u32 %v366, 4294901760
    %733 = vmatpush.msra.mxu0 %v732
    %v734 = vand.u32 %v365, 4294901760
    %735 = vmatpush.msra.mxu0 %v734
    %v736 = vand.u32 %v364, 4294901760
    %737 = vmatpush.msra.mxu0 %v736
    %v738 = vand.u32 %v363, 4294901760
    %739 = vmatpush.msra.mxu0 %v738
    %v740 = vand.u32 %v362, 4294901760
    %741 = vmatpush.msra.mxu0 %v740
    %v742 = vand.u32 %v361, 4294901760
    %743 = vmatpush.msra.mxu0 %v742
    %v744 = vand.u32 %v355, 4294901760
    %745 = vmatmul.f32.gmra.mxu0 %v744
    %v746 = vpop.f32.mrf.mxu0
    %v747 = vadd.f32 %v706, %v746
    %v748 = vand.u32 %v359, 4294901760
    %749 = vmatmul.f32.gmra.mxu0 %v748
    %v750 = vpop.f32.mrf.mxu0
    %v751 = vadd.f32 %v710, %v750
    %752 = vdwg.mxu0
    %v753 = vld [vmem:[#allocation4] sm:$0xff]
    %v754 = vld [vmem:[#allocation4 + $0x8] sm:$0xff]
    %v755 = vld [vmem:[#allocation9] sm:$0xff]
    %v756 = vld [vmem:[#allocation9 + $0x8] sm:$0xff]
    %v757 = vld [vmem:[#allocation9 + $0x10] sm:$0xff]
    %v758 = vld [vmem:[#allocation9 + $0x18] sm:$0xff]
    %v760 = vsel %vm138, %v753, 0
    %v763 = vsel %vm138, %v754, 0
    %765 = vmatpush.msra.mxu0 0.0
    %766 = vmatpush.msra.mxu0 0.0
    %767 = vmatpush.msra.mxu0 0.0
    %768 = vmatpush.msra.mxu0 0.0
    %769 = vmatpush.msra.mxu0 0.0
    %770 = vmatpush.msra.mxu0 0.0
    %771 = vmatpush.msra.mxu0 0.0
    %772 = vmatpush.msra.mxu0 0.0
    %773 = vmatpush.msra.mxu0 0.0
    %774 = vmatpush.msra.mxu0 0.0
    %775 = vmatpush.msra.mxu0 0.0
    %776 = vmatpush.msra.mxu0 0.0
    %v777 = vand.u32 %v758, 4294901760
    %778 = vmatpush.msra.mxu0 %v777
    %v779 = vand.u32 %v757, 4294901760
    %780 = vmatpush.msra.mxu0 %v779
    %v781 = vand.u32 %v756, 4294901760
    %782 = vmatpush.msra.mxu0 %v781
    %v783 = vand.u32 %v755, 4294901760
    %784 = vmatpush.msra.mxu0 %v783
    %v785 = vand.u32 %v760, 4294901760
    %v786 = vsub.f32 %v760, %v785
    %v787 = vand.u32 %v786, 4294901760
    %v788 = vsub.f32 %v786, %v787
    %v789 = vand.u32 %v788, 4294901760
    %790 = vmatmul.f32.gmra.mxu0 %v789
    %v791 = vpop.f32.mrf.mxu0
    %v792 = vadd.f32 %v379, %v791
    %v793 = vand.u32 %v763, 4294901760
    %v794 = vsub.f32 %v763, %v793
    %v795 = vand.u32 %v794, 4294901760
    %v796 = vsub.f32 %v794, %v795
    %v797 = vand.u32 %v796, 4294901760
    %798 = vmatmul.f32.gmra.mxu0 %v797
    %v799 = vpop.f32.mrf.mxu0
    %v800 = vadd.f32 %v379, %v799
    %801 = vdwg.mxu0
    %802 = vmatpush.msra.mxu0 0.0
    %803 = vmatpush.msra.mxu0 0.0
    %804 = vmatpush.msra.mxu0 0.0
    %805 = vmatpush.msra.mxu0 0.0
    %806 = vmatpush.msra.mxu0 0.0
    %807 = vmatpush.msra.mxu0 0.0
    %808 = vmatpush.msra.mxu0 0.0
    %809 = vmatpush.msra.mxu0 0.0
    %810 = vmatpush.msra.mxu0 0.0
    %811 = vmatpush.msra.mxu0 0.0
    %812 = vmatpush.msra.mxu0 0.0
    %813 = vmatpush.msra.mxu0 0.0
    %v814 = vand.u32 %v758, 4294901760
    %v815 = vsub.f32 %v758, %v814
    %v816 = vand.u32 %v815, 4294901760
    %v817 = vsub.f32 %v815, %v816
    %v818 = vand.u32 %v817, 4294901760
    %819 = vmatpush.msra.mxu0 %v818
    %v820 = vand.u32 %v757, 4294901760
    %v821 = vsub.f32 %v757, %v820
    %v822 = vand.u32 %v821, 4294901760
    %v823 = vsub.f32 %v821, %v822
    %v824 = vand.u32 %v823, 4294901760
    %825 = vmatpush.msra.mxu0 %v824
    %v826 = vand.u32 %v756, 4294901760
    %v827 = vsub.f32 %v756, %v826
    %v828 = vand.u32 %v827, 4294901760
    %v829 = vsub.f32 %v827, %v828
    %v830 = vand.u32 %v829, 4294901760
    %831 = vmatpush.msra.mxu0 %v830
    %v832 = vand.u32 %v755, 4294901760
    %v833 = vsub.f32 %v755, %v832
    %v834 = vand.u32 %v833, 4294901760
    %v835 = vsub.f32 %v833, %v834
    %v836 = vand.u32 %v835, 4294901760
    %837 = vmatpush.msra.mxu0 %v836
    %v838 = vand.u32 %v760, 4294901760
    %839 = vmatmul.f32.gmra.mxu0 %v838
    %v840 = vpop.f32.mrf.mxu0
    %v841 = vadd.f32 %v792, %v840
    %v842 = vand.u32 %v763, 4294901760
    %843 = vmatmul.f32.gmra.mxu0 %v842
    %v844 = vpop.f32.mrf.mxu0
    %v845 = vadd.f32 %v800, %v844
    %846 = vdwg.mxu0
    %847 = vmatpush.msra.mxu0 0.0
    %848 = vmatpush.msra.mxu0 0.0
    %849 = vmatpush.msra.mxu0 0.0
    %850 = vmatpush.msra.mxu0 0.0
    %851 = vmatpush.msra.mxu0 0.0
    %852 = vmatpush.msra.mxu0 0.0
    %853 = vmatpush.msra.mxu0 0.0
    %854 = vmatpush.msra.mxu0 0.0
    %855 = vmatpush.msra.mxu0 0.0
    %856 = vmatpush.msra.mxu0 0.0
    %857 = vmatpush.msra.mxu0 0.0
    %858 = vmatpush.msra.mxu0 0.0
    %v859 = vand.u32 %v758, 4294901760
    %v860 = vsub.f32 %v758, %v859
    %861 = vmatpush.msra.mxu0 %v860
    %v862 = vand.u32 %v757, 4294901760
    %v863 = vsub.f32 %v757, %v862
    %864 = vmatpush.msra.mxu0 %v863
    %v865 = vand.u32 %v756, 4294901760
    %v866 = vsub.f32 %v756, %v865
    %867 = vmatpush.msra.mxu0 %v866
    %v868 = vand.u32 %v755, 4294901760
    %v869 = vsub.f32 %v755, %v868
    %870 = vmatpush.msra.mxu0 %v869
    %v871 = vand.u32 %v760, 4294901760
    %v872 = vsub.f32 %v760, %v871
    %873 = vmatmul.f32.gmra.mxu0 %v872
    %v874 = vpop.f32.mrf.mxu0
    %v875 = vadd.f32 %v841, %v874
    %v876 = vand.u32 %v763, 4294901760
    %v877 = vsub.f32 %v763, %v876
    %878 = vmatmul.f32.gmra.mxu0 %v877
    %v879 = vpop.f32.mrf.mxu0
    %v880 = vadd.f32 %v845, %v879
    %881 = vdwg.mxu0
    %882 = vmatpush.msra.mxu0 0.0
    %883 = vmatpush.msra.mxu0 0.0
    %884 = vmatpush.msra.mxu0 0.0
    %885 = vmatpush.msra.mxu0 0.0
    %886 = vmatpush.msra.mxu0 0.0
    %887 = vmatpush.msra.mxu0 0.0
    %888 = vmatpush.msra.mxu0 0.0
    %889 = vmatpush.msra.mxu0 0.0
    %890 = vmatpush.msra.mxu0 0.0
    %891 = vmatpush.msra.mxu0 0.0
    %892 = vmatpush.msra.mxu0 0.0
    %893 = vmatpush.msra.mxu0 0.0
    %v894 = vand.u32 %v758, 4294901760
    %895 = vmatpush.msra.mxu0 %v894
    %v896 = vand.u32 %v757, 4294901760
    %897 = vmatpush.msra.mxu0 %v896
    %v898 = vand.u32 %v756, 4294901760
    %899 = vmatpush.msra.mxu0 %v898
    %v900 = vand.u32 %v755, 4294901760
    %901 = vmatpush.msra.mxu0 %v900
    %v902 = vand.u32 %v760, 4294901760
    %v903 = vsub.f32 %v760, %v902
    %v904 = vand.u32 %v903, 4294901760
    %905 = vmatmul.f32.gmra.mxu0 %v904
    %v906 = vpop.f32.mrf.mxu0
    %v907 = vadd.f32 %v875, %v906
    %v908 = vand.u32 %v763, 4294901760
    %v909 = vsub.f32 %v763, %v908
    %v910 = vand.u32 %v909, 4294901760
    %911 = vmatmul.f32.gmra.mxu0 %v910
    %v912 = vpop.f32.mrf.mxu0
    %v913 = vadd.f32 %v880, %v912
    %914 = vdwg.mxu0
    %915 = vmatpush.msra.mxu0 0.0
    %916 = vmatpush.msra.mxu0 0.0
    %917 = vmatpush.msra.mxu0 0.0
    %918 = vmatpush.msra.mxu0 0.0
    %919 = vmatpush.msra.mxu0 0.0
    %920 = vmatpush.msra.mxu0 0.0
    %921 = vmatpush.msra.mxu0 0.0
    %922 = vmatpush.msra.mxu0 0.0
    %923 = vmatpush.msra.mxu0 0.0
    %924 = vmatpush.msra.mxu0 0.0
    %925 = vmatpush.msra.mxu0 0.0
    %926 = vmatpush.msra.mxu0 0.0
    %v927 = vand.u32 %v758, 4294901760
    %v928 = vsub.f32 %v758, %v927
    %v929 = vand.u32 %v928, 4294901760
    %930 = vmatpush.msra.mxu0 %v929
    %v931 = vand.u32 %v757, 4294901760
    %v932 = vsub.f32 %v757, %v931
    %v933 = vand.u32 %v932, 4294901760
    %934 = vmatpush.msra.mxu0 %v933
    %v935 = vand.u32 %v756, 4294901760
    %v936 = vsub.f32 %v756, %v935
    %v937 = vand.u32 %v936, 4294901760
    %938 = vmatpush.msra.mxu0 %v937
    %v939 = vand.u32 %v755, 4294901760
    %v940 = vsub.f32 %v755, %v939
    %v941 = vand.u32 %v940, 4294901760
    %942 = vmatpush.msra.mxu0 %v941
    %v943 = vand.u32 %v760, 4294901760
    %944 = vmatmul.f32.gmra.mxu0 %v943
    %v945 = vpop.f32.mrf.mxu0
    %v946 = vadd.f32 %v907, %v945
    %v947 = vand.u32 %v763, 4294901760
    %948 = vmatmul.f32.gmra.mxu0 %v947
    %v949 = vpop.f32.mrf.mxu0
    %v950 = vadd.f32 %v913, %v949
    %951 = vdwg.mxu0
    %952 = vmatpush.msra.mxu0 0.0
    %953 = vmatpush.msra.mxu0 0.0
    %954 = vmatpush.msra.mxu0 0.0
    %955 = vmatpush.msra.mxu0 0.0
    %956 = vmatpush.msra.mxu0 0.0
    %957 = vmatpush.msra.mxu0 0.0
    %958 = vmatpush.msra.mxu0 0.0
    %959 = vmatpush.msra.mxu0 0.0
    %960 = vmatpush.msra.mxu0 0.0
    %961 = vmatpush.msra.mxu0 0.0
    %962 = vmatpush.msra.mxu0 0.0
    %963 = vmatpush.msra.mxu0 0.0
    %v964 = vand.u32 %v758, 4294901760
    %965 = vmatpush.msra.mxu0 %v964
    %v966 = vand.u32 %v757, 4294901760
    %967 = vmatpush.msra.mxu0 %v966
    %v968 = vand.u32 %v756, 4294901760
    %969 = vmatpush.msra.mxu0 %v968
    %v970 = vand.u32 %v755, 4294901760
    %971 = vmatpush.msra.mxu0 %v970
    %v972 = vand.u32 %v760, 4294901760
    %973 = vmatmul.f32.gmra.mxu0 %v972
    %v974 = vpop.f32.mrf.mxu0
    %v975 = vadd.f32 %v946, %v974
    %v976 = vand.u32 %v763, 4294901760
    %977 = vmatmul.f32.gmra.mxu0 %v976
    %v978 = vpop.f32.mrf.mxu0
    %v979 = vadd.f32 %v950, %v978
    %980 = vdwg.mxu0
    %981 = vst [vmem:[%s9] sm:$0xff] %v747
    %982 = vst [vmem:[%s9 + $0x8] sm:$0xff] %v751
    %983 = vst [vmem:[%s9 + $0x10] sm:$0xff] %v975
    %984 = vst [vmem:[%s9 + $0x18] sm:$0xff] %v979
    %v985 = vld [vmem:[#allocation10] sm:$0xff]
    %v986 = vld [vmem:[#allocation10 + $0x8] sm:$0xff]
    %v987 = vld [vmem:[#allocation10 + $0x10] sm:$0xff]
    %v988 = vld [vmem:[#allocation10 + $0x18] sm:$0xff]
    %v989 = vld [vmem:[#allocation10 + $0x20] sm:$0xff]
    %v990 = vld [vmem:[#allocation10 + $0x28] sm:$0xff]
    %v991 = vld [vmem:[#allocation10 + $0x30] sm:$0xff]
    %v992 = vld [vmem:[#allocation10 + $0x38] sm:$0xff]
    %v993 = vld [vmem:[#allocation10 + $0x40] sm:$0xff]
    %v994 = vld [vmem:[#allocation10 + $0x48] sm:$0xff]
    %v995 = vld [vmem:[#allocation10 + $0x50] sm:$0xff]
    %v996 = vld [vmem:[#allocation10 + $0x58] sm:$0xff]
    %v997 = vld [vmem:[#allocation10 + $0x60] sm:$0xff]
    %v998 = vld [vmem:[#allocation10 + $0x68] sm:$0xff]
    %v999 = vld [vmem:[#allocation10 + $0x70] sm:$0xff]
    %v1000 = vld [vmem:[#allocation10 + $0x78] sm:$0xff]
    %v1001 = vld [vmem:[%s8] sm:$0x1]
    %v1003 = vperm.slane %v1001, 0
    %v1005 = vand.u32 %v1000, 4294901760
    %1006 = vmatpush.msra.mxu0 %v1005
    %v1007 = vand.u32 %v999, 4294901760
    %1008 = vmatpush.msra.mxu0 %v1007
    %v1009 = vand.u32 %v998, 4294901760
    %1010 = vmatpush.msra.mxu0 %v1009
    %v1011 = vand.u32 %v997, 4294901760
    %1012 = vmatpush.msra.mxu0 %v1011
    %v1013 = vand.u32 %v996, 4294901760
    %1014 = vmatpush.msra.mxu0 %v1013
    %v1015 = vand.u32 %v995, 4294901760
    %1016 = vmatpush.msra.mxu0 %v1015
    %v1017 = vand.u32 %v994, 4294901760
    %1018 = vmatpush.msra.mxu0 %v1017
    %v1019 = vand.u32 %v993, 4294901760
    %1020 = vmatpush.msra.mxu0 %v1019
    %v1021 = vand.u32 %v992, 4294901760
    %1022 = vmatpush.msra.mxu0 %v1021
    %v1023 = vand.u32 %v991, 4294901760
    %1024 = vmatpush.msra.mxu0 %v1023
    %v1025 = vand.u32 %v990, 4294901760
    %1026 = vmatpush.msra.mxu0 %v1025
    %v1027 = vand.u32 %v989, 4294901760
    %1028 = vmatpush.msra.mxu0 %v1027
    %v1029 = vand.u32 %v988, 4294901760
    %1030 = vmatpush.msra.mxu0 %v1029
    %v1031 = vand.u32 %v987, 4294901760
    %1032 = vmatpush.msra.mxu0 %v1031
    %v1033 = vand.u32 %v986, 4294901760
    %1034 = vmatpush.msra.mxu0 %v1033
    %v1035 = vand.u32 %v985, 4294901760
    %1036 = vmatpush.msra.mxu0 %v1035
    %v1037 = vand.u32 %v747, 4294901760
    %v1038 = vsub.f32 %v747, %v1037
    %v1039 = vand.u32 %v1038, 4294901760
    %v1040 = vsub.f32 %v1038, %v1039
    %v1041 = vand.u32 %v1040, 4294901760
    %1042 = vmatmul.f32.gmra.mxu0 %v1041
    %v1043 = vpop.f32.mrf.mxu0
    %v1044 = vadd.f32 %v1003, %v1043
    %v1045 = vand.u32 %v751, 4294901760
    %v1046 = vsub.f32 %v751, %v1045
    %v1047 = vand.u32 %v1046, 4294901760
    %v1048 = vsub.f32 %v1046, %v1047
    %v1049 = vand.u32 %v1048, 4294901760
    %1050 = vmatmul.f32.gmra.mxu0 %v1049
    %v1051 = vpop.f32.mrf.mxu0
    %v1052 = vadd.f32 %v1003, %v1051
    %1053 = vdwg.mxu0
    %v1054 = vand.u32 %v1000, 4294901760
    %v1055 = vsub.f32 %v1000, %v1054
    %v1056 = vand.u32 %v1055, 4294901760
    %v1057 = vsub.f32 %v1055, %v1056
    %v1058 = vand.u32 %v1057, 4294901760
    %1059 = vmatpush.msra.mxu0 %v1058
    %v1060 = vand.u32 %v999, 4294901760
    %v1061 = vsub.f32 %v999, %v1060
    %v1062 = vand.u32 %v1061, 4294901760
    %v1063 = vsub.f32 %v1061, %v1062
    %v1064 = vand.u32 %v1063, 4294901760
    %1065 = vmatpush.msra.mxu0 %v1064
    %v1066 = vand.u32 %v998, 4294901760
    %v1067 = vsub.f32 %v998, %v1066
    %v1068 = vand.u32 %v1067, 4294901760
    %v1069 = vsub.f32 %v1067, %v1068
    %v1070 = vand.u32 %v1069, 4294901760
    %1071 = vmatpush.msra.mxu0 %v1070
    %v1072 = vand.u32 %v997, 4294901760
    %v1073 = vsub.f32 %v997, %v1072
    %v1074 = vand.u32 %v1073, 4294901760
    %v1075 = vsub.f32 %v1073, %v1074
    %v1076 = vand.u32 %v1075, 4294901760
    %1077 = vmatpush.msra.mxu0 %v1076
    %v1078 = vand.u32 %v996, 4294901760
    %v1079 = vsub.f32 %v996, %v1078
    %v1080 = vand.u32 %v1079, 4294901760
    %v1081 = vsub.f32 %v1079, %v1080
    %v1082 = vand.u32 %v1081, 4294901760
    %1083 = vmatpush.msra.mxu0 %v1082
    %v1084 = vand.u32 %v995, 4294901760
    %v1085 = vsub.f32 %v995, %v1084
    %v1086 = vand.u32 %v1085, 4294901760
    %v1087 = vsub.f32 %v1085, %v1086
    %v1088 = vand.u32 %v1087, 4294901760
    %1089 = vmatpush.msra.mxu0 %v1088
    %v1090 = vand.u32 %v994, 4294901760
    %v1091 = vsub.f32 %v994, %v1090
    %v1092 = vand.u32 %v1091, 4294901760
    %v1093 = vsub.f32 %v1091, %v1092
    %v1094 = vand.u32 %v1093, 4294901760
    %1095 = vmatpush.msra.mxu0 %v1094
    %v1096 = vand.u32 %v993, 4294901760
    %v1097 = vsub.f32 %v993, %v1096
    %v1098 = vand.u32 %v1097, 4294901760
    %v1099 = vsub.f32 %v1097, %v1098
    %v1100 = vand.u32 %v1099, 4294901760
    %1101 = vmatpush.msra.mxu0 %v1100
    %v1102 = vand.u32 %v992, 4294901760
    %v1103 = vsub.f32 %v992, %v1102
    %v1104 = vand.u32 %v1103, 4294901760
    %v1105 = vsub.f32 %v1103, %v1104
    %v1106 = vand.u32 %v1105, 4294901760
    %1107 = vmatpush.msra.mxu0 %v1106
    %v1108 = vand.u32 %v991, 4294901760
    %v1109 = vsub.f32 %v991, %v1108
    %v1110 = vand.u32 %v1109, 4294901760
    %v1111 = vsub.f32 %v1109, %v1110
    %v1112 = vand.u32 %v1111, 4294901760
    %1113 = vmatpush.msra.mxu0 %v1112
    %v1114 = vand.u32 %v990, 4294901760
    %v1115 = vsub.f32 %v990, %v1114
    %v1116 = vand.u32 %v1115, 4294901760
    %v1117 = vsub.f32 %v1115, %v1116
    %v1118 = vand.u32 %v1117, 4294901760
    %1119 = vmatpush.msra.mxu0 %v1118
    %v1120 = vand.u32 %v989, 4294901760
    %v1121 = vsub.f32 %v989, %v1120
    %v1122 = vand.u32 %v1121, 4294901760
    %v1123 = vsub.f32 %v1121, %v1122
    %v1124 = vand.u32 %v1123, 4294901760
    %1125 = vmatpush.msra.mxu0 %v1124
    %v1126 = vand.u32 %v988, 4294901760
    %v1127 = vsub.f32 %v988, %v1126
    %v1128 = vand.u32 %v1127, 4294901760
    %v1129 = vsub.f32 %v1127, %v1128
    %v1130 = vand.u32 %v1129, 4294901760
    %1131 = vmatpush.msra.mxu0 %v1130
    %v1132 = vand.u32 %v987, 4294901760
    %v1133 = vsub.f32 %v987, %v1132
    %v1134 = vand.u32 %v1133, 4294901760
    %v1135 = vsub.f32 %v1133, %v1134
    %v1136 = vand.u32 %v1135, 4294901760
    %1137 = vmatpush.msra.mxu0 %v1136
    %v1138 = vand.u32 %v986, 4294901760
    %v1139 = vsub.f32 %v986, %v1138
    %v1140 = vand.u32 %v1139, 4294901760
    %v1141 = vsub.f32 %v1139, %v1140
    %v1142 = vand.u32 %v1141, 4294901760
    %1143 = vmatpush.msra.mxu0 %v1142
    %v1144 = vand.u32 %v985, 4294901760
    %v1145 = vsub.f32 %v985, %v1144
    %v1146 = vand.u32 %v1145, 4294901760
    %v1147 = vsub.f32 %v1145, %v1146
    %v1148 = vand.u32 %v1147, 4294901760
    %1149 = vmatpush.msra.mxu0 %v1148
    %v1150 = vand.u32 %v747, 4294901760
    %1151 = vmatmul.f32.gmra.mxu0 %v1150
    %v1152 = vpop.f32.mrf.mxu0
    %v1153 = vadd.f32 %v1044, %v1152
    %v1154 = vand.u32 %v751, 4294901760
    %1155 = vmatmul.f32.gmra.mxu0 %v1154
    %v1156 = vpop.f32.mrf.mxu0
    %v1157 = vadd.f32 %v1052, %v1156
    %1158 = vdwg.mxu0
    %v1159 = vand.u32 %v1000, 4294901760
    %v1160 = vsub.f32 %v1000, %v1159
    %1161 = vmatpush.msra.mxu0 %v1160
    %v1162 = vand.u32 %v999, 4294901760
    %v1163 = vsub.f32 %v999, %v1162
    %1164 = vmatpush.msra.mxu0 %v1163
    %v1165 = vand.u32 %v998, 4294901760
    %v1166 = vsub.f32 %v998, %v1165
    %1167 = vmatpush.msra.mxu0 %v1166
    %v1168 = vand.u32 %v997, 4294901760
    %v1169 = vsub.f32 %v997, %v1168
    %1170 = vmatpush.msra.mxu0 %v1169
    %v1171 = vand.u32 %v996, 4294901760
    %v1172 = vsub.f32 %v996, %v1171
    %1173 = vmatpush.msra.mxu0 %v1172
    %v1174 = vand.u32 %v995, 4294901760
    %v1175 = vsub.f32 %v995, %v1174
    %1176 = vmatpush.msra.mxu0 %v1175
    %v1177 = vand.u32 %v994, 4294901760
    %v1178 = vsub.f32 %v994, %v1177
    %1179 = vmatpush.msra.mxu0 %v1178
    %v1180 = vand.u32 %v993, 4294901760
    %v1181 = vsub.f32 %v993, %v1180
    %1182 = vmatpush.msra.mxu0 %v1181
    %v1183 = vand.u32 %v992, 4294901760
    %v1184 = vsub.f32 %v992, %v1183
    %1185 = vmatpush.msra.mxu0 %v1184
    %v1186 = vand.u32 %v991, 4294901760
    %v1187 = vsub.f32 %v991, %v1186
    %1188 = vmatpush.msra.mxu0 %v1187
    %v1189 = vand.u32 %v990, 4294901760
    %v1190 = vsub.f32 %v990, %v1189
    %1191 = vmatpush.msra.mxu0 %v1190
    %v1192 = vand.u32 %v989, 4294901760
    %v1193 = vsub.f32 %v989, %v1192
    %1194 = vmatpush.msra.mxu0 %v1193
    %v1195 = vand.u32 %v988, 4294901760
    %v1196 = vsub.f32 %v988, %v1195
    %1197 = vmatpush.msra.mxu0 %v1196
    %v1198 = vand.u32 %v987, 4294901760
    %v1199 = vsub.f32 %v987, %v1198
    %1200 = vmatpush.msra.mxu0 %v1199
    %v1201 = vand.u32 %v986, 4294901760
    %v1202 = vsub.f32 %v986, %v1201
    %1203 = vmatpush.msra.mxu0 %v1202
    %v1204 = vand.u32 %v985, 4294901760
    %v1205 = vsub.f32 %v985, %v1204
    %1206 = vmatpush.msra.mxu0 %v1205
    %v1207 = vand.u32 %v747, 4294901760
    %v1208 = vsub.f32 %v747, %v1207
    %1209 = vmatmul.f32.gmra.mxu0 %v1208
    %v1210 = vpop.f32.mrf.mxu0
    %v1211 = vadd.f32 %v1153, %v1210
    %v1212 = vand.u32 %v751, 4294901760
    %v1213 = vsub.f32 %v751, %v1212
    %1214 = vmatmul.f32.gmra.mxu0 %v1213
    %v1215 = vpop.f32.mrf.mxu0
    %v1216 = vadd.f32 %v1157, %v1215
    %1217 = vdwg.mxu0
    %v1218 = vand.u32 %v1000, 4294901760
    %1219 = vmatpush.msra.mxu0 %v1218
    %v1220 = vand.u32 %v999, 4294901760
    %1221 = vmatpush.msra.mxu0 %v1220
    %v1222 = vand.u32 %v998, 4294901760
    %1223 = vmatpush.msra.mxu0 %v1222
    %v1224 = vand.u32 %v997, 4294901760
    %1225 = vmatpush.msra.mxu0 %v1224
    %v1226 = vand.u32 %v996, 4294901760
    %1227 = vmatpush.msra.mxu0 %v1226
    %v1228 = vand.u32 %v995, 4294901760
    %1229 = vmatpush.msra.mxu0 %v1228
    %v1230 = vand.u32 %v994, 4294901760
    %1231 = vmatpush.msra.mxu0 %v1230
    %v1232 = vand.u32 %v993, 4294901760
    %1233 = vmatpush.msra.mxu0 %v1232
    %v1234 = vand.u32 %v992, 4294901760
    %1235 = vmatpush.msra.mxu0 %v1234
    %v1236 = vand.u32 %v991, 4294901760
    %1237 = vmatpush.msra.mxu0 %v1236
    %v1238 = vand.u32 %v990, 4294901760
    %1239 = vmatpush.msra.mxu0 %v1238
    %v1240 = vand.u32 %v989, 4294901760
    %1241 = vmatpush.msra.mxu0 %v1240
    %v1242 = vand.u32 %v988, 4294901760
    %1243 = vmatpush.msra.mxu0 %v1242
    %v1244 = vand.u32 %v987, 4294901760
    %1245 = vmatpush.msra.mxu0 %v1244
    %v1246 = vand.u32 %v986, 4294901760
    %1247 = vmatpush.msra.mxu0 %v1246
    %v1248 = vand.u32 %v985, 4294901760
    %1249 = vmatpush.msra.mxu0 %v1248
    %v1250 = vand.u32 %v747, 4294901760
    %v1251 = vsub.f32 %v747, %v1250
    %v1252 = vand.u32 %v1251, 4294901760
    %1253 = vmatmul.f32.gmra.mxu0 %v1252
    %v1254 = vpop.f32.mrf.mxu0
    %v1255 = vadd.f32 %v1211, %v1254
    %v1256 = vand.u32 %v751, 4294901760
    %v1257 = vsub.f32 %v751, %v1256
    %v1258 = vand.u32 %v1257, 4294901760
    %1259 = vmatmul.f32.gmra.mxu0 %v1258
    %v1260 = vpop.f32.mrf.mxu0
    %v1261 = vadd.f32 %v1216, %v1260
    %1262 = vdwg.mxu0
    %v1263 = vand.u32 %v1000, 4294901760
    %v1264 = vsub.f32 %v1000, %v1263
    %v1265 = vand.u32 %v1264, 4294901760
    %1266 = vmatpush.msra.mxu0 %v1265
    %v1267 = vand.u32 %v999, 4294901760
    %v1268 = vsub.f32 %v999, %v1267
    %v1269 = vand.u32 %v1268, 4294901760
    %1270 = vmatpush.msra.mxu0 %v1269
    %v1271 = vand.u32 %v998, 4294901760
    %v1272 = vsub.f32 %v998, %v1271
    %v1273 = vand.u32 %v1272, 4294901760
    %1274 = vmatpush.msra.mxu0 %v1273
    %v1275 = vand.u32 %v997, 4294901760
    %v1276 = vsub.f32 %v997, %v1275
    %v1277 = vand.u32 %v1276, 4294901760
    %1278 = vmatpush.msra.mxu0 %v1277
    %v1279 = vand.u32 %v996, 4294901760
    %v1280 = vsub.f32 %v996, %v1279
    %v1281 = vand.u32 %v1280, 4294901760
    %1282 = vmatpush.msra.mxu0 %v1281
    %v1283 = vand.u32 %v995, 4294901760
    %v1284 = vsub.f32 %v995, %v1283
    %v1285 = vand.u32 %v1284, 4294901760
    %1286 = vmatpush.msra.mxu0 %v1285
    %v1287 = vand.u32 %v994, 4294901760
    %v1288 = vsub.f32 %v994, %v1287
    %v1289 = vand.u32 %v1288, 4294901760
    %1290 = vmatpush.msra.mxu0 %v1289
    %v1291 = vand.u32 %v993, 4294901760
    %v1292 = vsub.f32 %v993, %v1291
    %v1293 = vand.u32 %v1292, 4294901760
    %1294 = vmatpush.msra.mxu0 %v1293
    %v1295 = vand.u32 %v992, 4294901760
    %v1296 = vsub.f32 %v992, %v1295
    %v1297 = vand.u32 %v1296, 4294901760
    %1298 = vmatpush.msra.mxu0 %v1297
    %v1299 = vand.u32 %v991, 4294901760
    %v1300 = vsub.f32 %v991, %v1299
    %v1301 = vand.u32 %v1300, 4294901760
    %1302 = vmatpush.msra.mxu0 %v1301
    %v1303 = vand.u32 %v990, 4294901760
    %v1304 = vsub.f32 %v990, %v1303
    %v1305 = vand.u32 %v1304, 4294901760
    %1306 = vmatpush.msra.mxu0 %v1305
    %v1307 = vand.u32 %v989, 4294901760
    %v1308 = vsub.f32 %v989, %v1307
    %v1309 = vand.u32 %v1308, 4294901760
    %1310 = vmatpush.msra.mxu0 %v1309
    %v1311 = vand.u32 %v988, 4294901760
    %v1312 = vsub.f32 %v988, %v1311
    %v1313 = vand.u32 %v1312, 4294901760
    %1314 = vmatpush.msra.mxu0 %v1313
    %v1315 = vand.u32 %v987, 4294901760
    %v1316 = vsub.f32 %v987, %v1315
    %v1317 = vand.u32 %v1316, 4294901760
    %1318 = vmatpush.msra.mxu0 %v1317
    %v1319 = vand.u32 %v986, 4294901760
    %v1320 = vsub.f32 %v986, %v1319
    %v1321 = vand.u32 %v1320, 4294901760
    %1322 = vmatpush.msra.mxu0 %v1321
    %v1323 = vand.u32 %v985, 4294901760
    %v1324 = vsub.f32 %v985, %v1323
    %v1325 = vand.u32 %v1324, 4294901760
    %1326 = vmatpush.msra.mxu0 %v1325
    %v1327 = vand.u32 %v747, 4294901760
    %1328 = vmatmul.f32.gmra.mxu0 %v1327
    %v1329 = vpop.f32.mrf.mxu0
    %v1330 = vadd.f32 %v1255, %v1329
    %v1331 = vand.u32 %v751, 4294901760
    %1332 = vmatmul.f32.gmra.mxu0 %v1331
    %v1333 = vpop.f32.mrf.mxu0
    %v1334 = vadd.f32 %v1261, %v1333
    %1335 = vdwg.mxu0
    %v1336 = vand.u32 %v1000, 4294901760
    %1337 = vmatpush.msra.mxu0 %v1336
    %v1338 = vand.u32 %v999, 4294901760
    %1339 = vmatpush.msra.mxu0 %v1338
    %v1340 = vand.u32 %v998, 4294901760
    %1341 = vmatpush.msra.mxu0 %v1340
    %v1342 = vand.u32 %v997, 4294901760
    %1343 = vmatpush.msra.mxu0 %v1342
    %v1344 = vand.u32 %v996, 4294901760
    %1345 = vmatpush.msra.mxu0 %v1344
    %v1346 = vand.u32 %v995, 4294901760
    %1347 = vmatpush.msra.mxu0 %v1346
    %v1348 = vand.u32 %v994, 4294901760
    %1349 = vmatpush.msra.mxu0 %v1348
    %v1350 = vand.u32 %v993, 4294901760
    %1351 = vmatpush.msra.mxu0 %v1350
    %v1352 = vand.u32 %v992, 4294901760
    %1353 = vmatpush.msra.mxu0 %v1352
    %v1354 = vand.u32 %v991, 4294901760
    %1355 = vmatpush.msra.mxu0 %v1354
    %v1356 = vand.u32 %v990, 4294901760
    %1357 = vmatpush.msra.mxu0 %v1356
    %v1358 = vand.u32 %v989, 4294901760
    %1359 = vmatpush.msra.mxu0 %v1358
    %v1360 = vand.u32 %v988, 4294901760
    %1361 = vmatpush.msra.mxu0 %v1360
    %v1362 = vand.u32 %v987, 4294901760
    %1363 = vmatpush.msra.mxu0 %v1362
    %v1364 = vand.u32 %v986, 4294901760
    %1365 = vmatpush.msra.mxu0 %v1364
    %v1366 = vand.u32 %v985, 4294901760
    %1367 = vmatpush.msra.mxu0 %v1366
    %v1368 = vand.u32 %v747, 4294901760
    %1369 = vmatmul.f32.gmra.mxu0 %v1368
    %v1370 = vpop.f32.mrf.mxu0
    %v1371 = vadd.f32 %v1330, %v1370
    %v1372 = vand.u32 %v751, 4294901760
    %1373 = vmatmul.f32.gmra.mxu0 %v1372
    %v1374 = vpop.f32.mrf.mxu0
    %v1375 = vadd.f32 %v1334, %v1374
    %1376 = vdwg.mxu0
    %1377 = vst [vmem:[%s10] sm:$0xff] %v1371
    %1378 = vst [vmem:[%s10 + $0x8] sm:$0xff] %v1375
    %v1379 = vld [vmem:[#allocation10] sm:$0xff]
    %v1380 = vld [vmem:[#allocation10 + $0x8] sm:$0xff]
    %v1381 = vld [vmem:[#allocation10 + $0x10] sm:$0xff]
    %v1382 = vld [vmem:[#allocation10 + $0x18] sm:$0xff]
    %v1383 = vld [vmem:[#allocation10 + $0x20] sm:$0xff]
    %v1384 = vld [vmem:[#allocation10 + $0x28] sm:$0xff]
    %v1385 = vld [vmem:[#allocation10 + $0x30] sm:$0xff]
    %v1386 = vld [vmem:[#allocation10 + $0x38] sm:$0xff]
    %v1387 = vld [vmem:[#allocation10 + $0x40] sm:$0xff]
    %v1388 = vld [vmem:[#allocation10 + $0x48] sm:$0xff]
    %v1389 = vld [vmem:[#allocation10 + $0x50] sm:$0xff]
    %v1390 = vld [vmem:[#allocation10 + $0x58] sm:$0xff]
    %v1391 = vld [vmem:[#allocation10 + $0x60] sm:$0xff]
    %v1392 = vld [vmem:[#allocation10 + $0x68] sm:$0xff]
    %v1393 = vld [vmem:[#allocation10 + $0x70] sm:$0xff]
    %v1394 = vld [vmem:[#allocation10 + $0x78] sm:$0xff]
    %v1395 = vld [vmem:[%s8] sm:$0x1]
    %v1397 = vperm.slane %v1395, 0
    %v1399 = vand.u32 %v1394, 4294901760
    %1400 = vmatpush.msra.mxu0 %v1399
    %v1401 = vand.u32 %v1393, 4294901760
    %1402 = vmatpush.msra.mxu0 %v1401
    %v1403 = vand.u32 %v1392, 4294901760
    %1404 = vmatpush.msra.mxu0 %v1403
    %v1405 = vand.u32 %v1391, 4294901760
    %1406 = vmatpush.msra.mxu0 %v1405
    %v1407 = vand.u32 %v1390, 4294901760
    %1408 = vmatpush.msra.mxu0 %v1407
    %v1409 = vand.u32 %v1389, 4294901760
    %1410 = vmatpush.msra.mxu0 %v1409
    %v1411 = vand.u32 %v1388, 4294901760
    %1412 = vmatpush.msra.mxu0 %v1411
    %v1413 = vand.u32 %v1387, 4294901760
    %1414 = vmatpush.msra.mxu0 %v1413
    %v1415 = vand.u32 %v1386, 4294901760
    %1416 = vmatpush.msra.mxu0 %v1415
    %v1417 = vand.u32 %v1385, 4294901760
    %1418 = vmatpush.msra.mxu0 %v1417
    %v1419 = vand.u32 %v1384, 4294901760
    %1420 = vmatpush.msra.mxu0 %v1419
    %v1421 = vand.u32 %v1383, 4294901760
    %1422 = vmatpush.msra.mxu0 %v1421
    %v1423 = vand.u32 %v1382, 4294901760
    %1424 = vmatpush.msra.mxu0 %v1423
    %v1425 = vand.u32 %v1381, 4294901760
    %1426 = vmatpush.msra.mxu0 %v1425
    %v1427 = vand.u32 %v1380, 4294901760
    %1428 = vmatpush.msra.mxu0 %v1427
    %v1429 = vand.u32 %v1379, 4294901760
    %1430 = vmatpush.msra.mxu0 %v1429
    %v1431 = vand.u32 %v975, 4294901760
    %v1432 = vsub.f32 %v975, %v1431
    %v1433 = vand.u32 %v1432, 4294901760
    %v1434 = vsub.f32 %v1432, %v1433
    %v1435 = vand.u32 %v1434, 4294901760
    %1436 = vmatmul.f32.gmra.mxu0 %v1435
    %v1437 = vpop.f32.mrf.mxu0
    %v1438 = vadd.f32 %v1397, %v1437
    %v1439 = vand.u32 %v979, 4294901760
    %v1440 = vsub.f32 %v979, %v1439
    %v1441 = vand.u32 %v1440, 4294901760
    %v1442 = vsub.f32 %v1440, %v1441
    %v1443 = vand.u32 %v1442, 4294901760
    %1444 = vmatmul.f32.gmra.mxu0 %v1443
    %v1445 = vpop.f32.mrf.mxu0
    %v1446 = vadd.f32 %v1397, %v1445
    %1447 = vdwg.mxu0
    %v1448 = vand.u32 %v1394, 4294901760
    %v1449 = vsub.f32 %v1394, %v1448
    %v1450 = vand.u32 %v1449, 4294901760
    %v1451 = vsub.f32 %v1449, %v1450
    %v1452 = vand.u32 %v1451, 4294901760
    %1453 = vmatpush.msra.mxu0 %v1452
    %v1454 = vand.u32 %v1393, 4294901760
    %v1455 = vsub.f32 %v1393, %v1454
    %v1456 = vand.u32 %v1455, 4294901760
    %v1457 = vsub.f32 %v1455, %v1456
    %v1458 = vand.u32 %v1457, 4294901760
    %1459 = vmatpush.msra.mxu0 %v1458
    %v1460 = vand.u32 %v1392, 4294901760
    %v1461 = vsub.f32 %v1392, %v1460
    %v1462 = vand.u32 %v1461, 4294901760
    %v1463 = vsub.f32 %v1461, %v1462
    %v1464 = vand.u32 %v1463, 4294901760
    %1465 = vmatpush.msra.mxu0 %v1464
    %v1466 = vand.u32 %v1391, 4294901760
    %v1467 = vsub.f32 %v1391, %v1466
    %v1468 = vand.u32 %v1467, 4294901760
    %v1469 = vsub.f32 %v1467, %v1468
    %v1470 = vand.u32 %v1469, 4294901760
    %1471 = vmatpush.msra.mxu0 %v1470
    %v1472 = vand.u32 %v1390, 4294901760
    %v1473 = vsub.f32 %v1390, %v1472
    %v1474 = vand.u32 %v1473, 4294901760
    %v1475 = vsub.f32 %v1473, %v1474
    %v1476 = vand.u32 %v1475, 4294901760
    %1477 = vmatpush.msra.mxu0 %v1476
    %v1478 = vand.u32 %v1389, 4294901760
    %v1479 = vsub.f32 %v1389, %v1478
    %v1480 = vand.u32 %v1479, 4294901760
    %v1481 = vsub.f32 %v1479, %v1480
    %v1482 = vand.u32 %v1481, 4294901760
    %1483 = vmatpush.msra.mxu0 %v1482
    %v1484 = vand.u32 %v1388, 4294901760
    %v1485 = vsub.f32 %v1388, %v1484
    %v1486 = vand.u32 %v1485, 4294901760
    %v1487 = vsub.f32 %v1485, %v1486
    %v1488 = vand.u32 %v1487, 4294901760
    %1489 = vmatpush.msra.mxu0 %v1488
    %v1490 = vand.u32 %v1387, 4294901760
    %v1491 = vsub.f32 %v1387, %v1490
    %v1492 = vand.u32 %v1491, 4294901760
    %v1493 = vsub.f32 %v1491, %v1492
    %v1494 = vand.u32 %v1493, 4294901760
    %1495 = vmatpush.msra.mxu0 %v1494
    %v1496 = vand.u32 %v1386, 4294901760
    %v1497 = vsub.f32 %v1386, %v1496
    %v1498 = vand.u32 %v1497, 4294901760
    %v1499 = vsub.f32 %v1497, %v1498
    %v1500 = vand.u32 %v1499, 4294901760
    %1501 = vmatpush.msra.mxu0 %v1500
    %v1502 = vand.u32 %v1385, 4294901760
    %v1503 = vsub.f32 %v1385, %v1502
    %v1504 = vand.u32 %v1503, 4294901760
    %v1505 = vsub.f32 %v1503, %v1504
    %v1506 = vand.u32 %v1505, 4294901760
    %1507 = vmatpush.msra.mxu0 %v1506
    %v1508 = vand.u32 %v1384, 4294901760
    %v1509 = vsub.f32 %v1384, %v1508
    %v1510 = vand.u32 %v1509, 4294901760
    %v1511 = vsub.f32 %v1509, %v1510
    %v1512 = vand.u32 %v1511, 4294901760
    %1513 = vmatpush.msra.mxu0 %v1512
    %v1514 = vand.u32 %v1383, 4294901760
    %v1515 = vsub.f32 %v1383, %v1514
    %v1516 = vand.u32 %v1515, 4294901760
    %v1517 = vsub.f32 %v1515, %v1516
    %v1518 = vand.u32 %v1517, 4294901760
    %1519 = vmatpush.msra.mxu0 %v1518
    %v1520 = vand.u32 %v1382, 4294901760
    %v1521 = vsub.f32 %v1382, %v1520
    %v1522 = vand.u32 %v1521, 4294901760
    %v1523 = vsub.f32 %v1521, %v1522
    %v1524 = vand.u32 %v1523, 4294901760
    %1525 = vmatpush.msra.mxu0 %v1524
    %v1526 = vand.u32 %v1381, 4294901760
    %v1527 = vsub.f32 %v1381, %v1526
    %v1528 = vand.u32 %v1527, 4294901760
    %v1529 = vsub.f32 %v1527, %v1528
    %v1530 = vand.u32 %v1529, 4294901760
    %1531 = vmatpush.msra.mxu0 %v1530
    %v1532 = vand.u32 %v1380, 4294901760
    %v1533 = vsub.f32 %v1380, %v1532
    %v1534 = vand.u32 %v1533, 4294901760
    %v1535 = vsub.f32 %v1533, %v1534
    %v1536 = vand.u32 %v1535, 4294901760
    %1537 = vmatpush.msra.mxu0 %v1536
    %v1538 = vand.u32 %v1379, 4294901760
    %v1539 = vsub.f32 %v1379, %v1538
    %v1540 = vand.u32 %v1539, 4294901760
    %v1541 = vsub.f32 %v1539, %v1540
    %v1542 = vand.u32 %v1541, 4294901760
    %1543 = vmatpush.msra.mxu0 %v1542
    %v1544 = vand.u32 %v975, 4294901760
    %1545 = vmatmul.f32.gmra.mxu0 %v1544
    %v1546 = vpop.f32.mrf.mxu0
    %v1547 = vadd.f32 %v1438, %v1546
    %v1548 = vand.u32 %v979, 4294901760
    %1549 = vmatmul.f32.gmra.mxu0 %v1548
    %v1550 = vpop.f32.mrf.mxu0
    %v1551 = vadd.f32 %v1446, %v1550
    %1552 = vdwg.mxu0
    %v1553 = vand.u32 %v1394, 4294901760
    %v1554 = vsub.f32 %v1394, %v1553
    %1555 = vmatpush.msra.mxu0 %v1554
    %v1556 = vand.u32 %v1393, 4294901760
    %v1557 = vsub.f32 %v1393, %v1556
    %1558 = vmatpush.msra.mxu0 %v1557
    %v1559 = vand.u32 %v1392, 4294901760
    %v1560 = vsub.f32 %v1392, %v1559
    %1561 = vmatpush.msra.mxu0 %v1560
    %v1562 = vand.u32 %v1391, 4294901760
    %v1563 = vsub.f32 %v1391, %v1562
    %1564 = vmatpush.msra.mxu0 %v1563
    %v1565 = vand.u32 %v1390, 4294901760
    %v1566 = vsub.f32 %v1390, %v1565
    %1567 = vmatpush.msra.mxu0 %v1566
    %v1568 = vand.u32 %v1389, 4294901760
    %v1569 = vsub.f32 %v1389, %v1568
    %1570 = vmatpush.msra.mxu0 %v1569
    %v1571 = vand.u32 %v1388, 4294901760
    %v1572 = vsub.f32 %v1388, %v1571
    %1573 = vmatpush.msra.mxu0 %v1572
    %v1574 = vand.u32 %v1387, 4294901760
    %v1575 = vsub.f32 %v1387, %v1574
    %1576 = vmatpush.msra.mxu0 %v1575
    %v1577 = vand.u32 %v1386, 4294901760
    %v1578 = vsub.f32 %v1386, %v1577
    %1579 = vmatpush.msra.mxu0 %v1578
    %v1580 = vand.u32 %v1385, 4294901760
    %v1581 = vsub.f32 %v1385, %v1580
    %1582 = vmatpush.msra.mxu0 %v1581
    %v1583 = vand.u32 %v1384, 4294901760
    %v1584 = vsub.f32 %v1384, %v1583
    %1585 = vmatpush.msra.mxu0 %v1584
    %v1586 = vand.u32 %v1383, 4294901760
    %v1587 = vsub.f32 %v1383, %v1586
    %1588 = vmatpush.msra.mxu0 %v1587
    %v1589 = vand.u32 %v1382, 4294901760
    %v1590 = vsub.f32 %v1382, %v1589
    %1591 = vmatpush.msra.mxu0 %v1590
    %v1592 = vand.u32 %v1381, 4294901760
    %v1593 = vsub.f32 %v1381, %v1592
    %1594 = vmatpush.msra.mxu0 %v1593
    %v1595 = vand.u32 %v1380, 4294901760
    %v1596 = vsub.f32 %v1380, %v1595
    %1597 = vmatpush.msra.mxu0 %v1596
    %v1598 = vand.u32 %v1379, 4294901760
    %v1599 = vsub.f32 %v1379, %v1598
    %1600 = vmatpush.msra.mxu0 %v1599
    %v1601 = vand.u32 %v975, 4294901760
    %v1602 = vsub.f32 %v975, %v1601
    %1603 = vmatmul.f32.gmra.mxu0 %v1602
    %v1604 = vpop.f32.mrf.mxu0
    %v1605 = vadd.f32 %v1547, %v1604
    %v1606 = vand.u32 %v979, 4294901760
    %v1607 = vsub.f32 %v979, %v1606
    %1608 = vmatmul.f32.gmra.mxu0 %v1607
    %v1609 = vpop.f32.mrf.mxu0
    %v1610 = vadd.f32 %v1551, %v1609
    %1611 = vdwg.mxu0
    %v1612 = vand.u32 %v1394, 4294901760
    %1613 = vmatpush.msra.mxu0 %v1612
    %v1614 = vand.u32 %v1393, 4294901760
    %1615 = vmatpush.msra.mxu0 %v1614
    %v1616 = vand.u32 %v1392, 4294901760
    %1617 = vmatpush.msra.mxu0 %v1616
    %v1618 = vand.u32 %v1391, 4294901760
    %1619 = vmatpush.msra.mxu0 %v1618
    %v1620 = vand.u32 %v1390, 4294901760
    %1621 = vmatpush.msra.mxu0 %v1620
    %v1622 = vand.u32 %v1389, 4294901760
    %1623 = vmatpush.msra.mxu0 %v1622
    %v1624 = vand.u32 %v1388, 4294901760
    %1625 = vmatpush.msra.mxu0 %v1624
    %v1626 = vand.u32 %v1387, 4294901760
    %1627 = vmatpush.msra.mxu0 %v1626
    %v1628 = vand.u32 %v1386, 4294901760
    %1629 = vmatpush.msra.mxu0 %v1628
    %v1630 = vand.u32 %v1385, 4294901760
    %1631 = vmatpush.msra.mxu0 %v1630
    %v1632 = vand.u32 %v1384, 4294901760
    %1633 = vmatpush.msra.mxu0 %v1632
    %v1634 = vand.u32 %v1383, 4294901760
    %1635 = vmatpush.msra.mxu0 %v1634
    %v1636 = vand.u32 %v1382, 4294901760
    %1637 = vmatpush.msra.mxu0 %v1636
    %v1638 = vand.u32 %v1381, 4294901760
    %1639 = vmatpush.msra.mxu0 %v1638
    %v1640 = vand.u32 %v1380, 4294901760
    %1641 = vmatpush.msra.mxu0 %v1640
    %v1642 = vand.u32 %v1379, 4294901760
    %1643 = vmatpush.msra.mxu0 %v1642
    %v1644 = vand.u32 %v975, 4294901760
    %v1645 = vsub.f32 %v975, %v1644
    %v1646 = vand.u32 %v1645, 4294901760
    %1647 = vmatmul.f32.gmra.mxu0 %v1646
    %v1648 = vpop.f32.mrf.mxu0
    %v1649 = vadd.f32 %v1605, %v1648
    %v1650 = vand.u32 %v979, 4294901760
    %v1651 = vsub.f32 %v979, %v1650
    %v1652 = vand.u32 %v1651, 4294901760
    %1653 = vmatmul.f32.gmra.mxu0 %v1652
    %v1654 = vpop.f32.mrf.mxu0
    %v1655 = vadd.f32 %v1610, %v1654
    %1656 = vdwg.mxu0
    %v1657 = vand.u32 %v1394, 4294901760
    %v1658 = vsub.f32 %v1394, %v1657
    %v1659 = vand.u32 %v1658, 4294901760
    %1660 = vmatpush.msra.mxu0 %v1659
    %v1661 = vand.u32 %v1393, 4294901760
    %v1662 = vsub.f32 %v1393, %v1661
    %v1663 = vand.u32 %v1662, 4294901760
    %1664 = vmatpush.msra.mxu0 %v1663
    %v1665 = vand.u32 %v1392, 4294901760
    %v1666 = vsub.f32 %v1392, %v1665
    %v1667 = vand.u32 %v1666, 4294901760
    %1668 = vmatpush.msra.mxu0 %v1667
    %v1669 = vand.u32 %v1391, 4294901760
    %v1670 = vsub.f32 %v1391, %v1669
    %v1671 = vand.u32 %v1670, 4294901760
    %1672 = vmatpush.msra.mxu0 %v1671
    %v1673 = vand.u32 %v1390, 4294901760
    %v1674 = vsub.f32 %v1390, %v1673
    %v1675 = vand.u32 %v1674, 4294901760
    %1676 = vmatpush.msra.mxu0 %v1675
    %v1677 = vand.u32 %v1389, 4294901760
    %v1678 = vsub.f32 %v1389, %v1677
    %v1679 = vand.u32 %v1678, 4294901760
    %1680 = vmatpush.msra.mxu0 %v1679
    %v1681 = vand.u32 %v1388, 4294901760
    %v1682 = vsub.f32 %v1388, %v1681
    %v1683 = vand.u32 %v1682, 4294901760
    %1684 = vmatpush.msra.mxu0 %v1683
    %v1685 = vand.u32 %v1387, 4294901760
    %v1686 = vsub.f32 %v1387, %v1685
    %v1687 = vand.u32 %v1686, 4294901760
    %1688 = vmatpush.msra.mxu0 %v1687
    %v1689 = vand.u32 %v1386, 4294901760
    %v1690 = vsub.f32 %v1386, %v1689
    %v1691 = vand.u32 %v1690, 4294901760
    %1692 = vmatpush.msra.mxu0 %v1691
    %v1693 = vand.u32 %v1385, 4294901760
    %v1694 = vsub.f32 %v1385, %v1693
    %v1695 = vand.u32 %v1694, 4294901760
    %1696 = vmatpush.msra.mxu0 %v1695
    %v1697 = vand.u32 %v1384, 4294901760
    %v1698 = vsub.f32 %v1384, %v1697
    %v1699 = vand.u32 %v1698, 4294901760
    %1700 = vmatpush.msra.mxu0 %v1699
    %v1701 = vand.u32 %v1383, 4294901760
    %v1702 = vsub.f32 %v1383, %v1701
    %v1703 = vand.u32 %v1702, 4294901760
    %1704 = vmatpush.msra.mxu0 %v1703
    %v1705 = vand.u32 %v1382, 4294901760
    %v1706 = vsub.f32 %v1382, %v1705
    %v1707 = vand.u32 %v1706, 4294901760
    %1708 = vmatpush.msra.mxu0 %v1707
    %v1709 = vand.u32 %v1381, 4294901760
    %v1710 = vsub.f32 %v1381, %v1709
    %v1711 = vand.u32 %v1710, 4294901760
    %1712 = vmatpush.msra.mxu0 %v1711
    %v1713 = vand.u32 %v1380, 4294901760
    %v1714 = vsub.f32 %v1380, %v1713
    %v1715 = vand.u32 %v1714, 4294901760
    %1716 = vmatpush.msra.mxu0 %v1715
    %v1717 = vand.u32 %v1379, 4294901760
    %v1718 = vsub.f32 %v1379, %v1717
    %v1719 = vand.u32 %v1718, 4294901760
    %1720 = vmatpush.msra.mxu0 %v1719
    %v1721 = vand.u32 %v975, 4294901760
    %1722 = vmatmul.f32.gmra.mxu0 %v1721
    %v1723 = vpop.f32.mrf.mxu0
    %v1724 = vadd.f32 %v1649, %v1723
    %v1725 = vand.u32 %v979, 4294901760
    %1726 = vmatmul.f32.gmra.mxu0 %v1725
    %v1727 = vpop.f32.mrf.mxu0
    %v1728 = vadd.f32 %v1655, %v1727
    %1729 = vdwg.mxu0
    %v1730 = vand.u32 %v1394, 4294901760
    %1731 = vmatpush.msra.mxu0 %v1730
    %v1732 = vand.u32 %v1393, 4294901760
    %1733 = vmatpush.msra.mxu0 %v1732
    %v1734 = vand.u32 %v1392, 4294901760
    %1735 = vmatpush.msra.mxu0 %v1734
    %v1736 = vand.u32 %v1391, 4294901760
    %1737 = vmatpush.msra.mxu0 %v1736
    %v1738 = vand.u32 %v1390, 4294901760
    %1739 = vmatpush.msra.mxu0 %v1738
    %v1740 = vand.u32 %v1389, 4294901760
    %1741 = vmatpush.msra.mxu0 %v1740
    %v1742 = vand.u32 %v1388, 4294901760
    %1743 = vmatpush.msra.mxu0 %v1742
    %v1744 = vand.u32 %v1387, 4294901760
    %1745 = vmatpush.msra.mxu0 %v1744
    %v1746 = vand.u32 %v1386, 4294901760
    %1747 = vmatpush.msra.mxu0 %v1746
    %v1748 = vand.u32 %v1385, 4294901760
    %1749 = vmatpush.msra.mxu0 %v1748
    %v1750 = vand.u32 %v1384, 4294901760
    %1751 = vmatpush.msra.mxu0 %v1750
    %v1752 = vand.u32 %v1383, 4294901760
    %1753 = vmatpush.msra.mxu0 %v1752
    %v1754 = vand.u32 %v1382, 4294901760
    %1755 = vmatpush.msra.mxu0 %v1754
    %v1756 = vand.u32 %v1381, 4294901760
    %1757 = vmatpush.msra.mxu0 %v1756
    %v1758 = vand.u32 %v1380, 4294901760
    %1759 = vmatpush.msra.mxu0 %v1758
    %v1760 = vand.u32 %v1379, 4294901760
    %1761 = vmatpush.msra.mxu0 %v1760
    %v1762 = vand.u32 %v975, 4294901760
    %1763 = vmatmul.f32.gmra.mxu0 %v1762
    %v1764 = vpop.f32.mrf.mxu0
    %v1765 = vadd.f32 %v1724, %v1764
    %v1766 = vand.u32 %v979, 4294901760
    %1767 = vmatmul.f32.gmra.mxu0 %v1766
    %v1768 = vpop.f32.mrf.mxu0
    %v1769 = vadd.f32 %v1728, %v1768
    %1770 = vdwg.mxu0
    %1771 = vst [vmem:[%s10 + $0x10] sm:$0xff] %v1765
    %1772 = vst [vmem:[%s10 + $0x18] sm:$0xff] %v1769
    // Predicated region
    $region62: #{_forward3_routed.1} parent=1 // pred_check
      _
    $region63: #{_forward3_routed.1} parent=1 // pred_check_branch
      %1774 = sbr.rel (0) target = $region65
    $region64: #{_forward3_routed.1} parent=1 // pred_region
      _
    $region65: #{_forward3_routed.1} parent=1 // pred_fallthru
      _
    // Predicated region
    $region66: #{_forward3_routed.1} parent=1 // pred_check
      _
    $region67: #{_forward3_routed.1} parent=1 // pred_check_branch
      %1776 = sbr.rel (0) target = $region69
    $region68: #{_forward3_routed.1} parent=1 // pred_region
      _
    $region69: #{_forward3_routed.1} parent=1 // pred_fallthru
      _
    // Predicated region
    $region70: #{_forward3_routed.1} parent=1 // pred_check
      _
    $region71: #{_forward3_routed.1} parent=1 // pred_check_branch
      %1778 = sbr.rel (0) target = $region73
    $region72: #{_forward3_routed.1} parent=1 // pred_region
      _
    $region73: #{_forward3_routed.1} parent=1 // pred_fallthru
      _
    // Predicated region
    $region74: #{_forward3_routed.1} parent=1 // pred_check
      _
    $region75: #{_forward3_routed.1} parent=1 // pred_check_branch
      %1780 = sbr.rel (0) target = $region77
    $region76: #{_forward3_routed.1} parent=1 // pred_region
      _
    $region77: #{_forward3_routed.1} parent=1 // pred_fallthru
      _
    %1781 = vsyncpa [#allocation3], 1
    %1782 = vsyncpa [#allocation5], 1
    %1783 = vsyncpa [#allocation8], 1
    %1784 = vsyncpa [#allocation11], 1

</llo_original>
